<compile_context>
chip_gen: v6e
topology: v6e:2x2x1
jax: 0.10.0
libtpu: 0.0.40
codegen_flags: <defaults>
</compile_context>

<pallas_src>
import functools

import jax
import jax.numpy as jnp
from jax.experimental import pallas as pl
from jax.experimental.pallas import tpu as pltpu

_VMEM_LIMIT = 48 * 1024 * 1024   # headroom under v7x's 64 MiB physical VMEM


def _round_up(x, m):
    return ((x + m - 1) // m) * m


def _choose_tm(M, cap=1024):
    """Lane tile for M = B*Ho*Wo: as big as possible (amortize per-step overhead),
    but split into >=2 grid steps when there is enough work so v7x megacore can
    shard the 'parallel' axis across both TensorCores."""
    tm = min(cap, _round_up(M, 128))
    if M > 128 and _round_up(M, tm) // tm < 2:
        tm = max(128, _round_up((M + 1) // 2, 128))
    return tm


def _choose_plane_group(p):
    """Planes per grid step for the separable resize; keep >=2 grid steps."""
    if p < 4:
        return 1
    g = min(8, p // 2)
    while p % g:
        g -= 1
    return g


# ----------------------------------------------------------------------------
# Pallas kernels
# ----------------------------------------------------------------------------
def _convT_kernel(p_ref, w_ref, b_ref, o_ref, *, relu):
    # p: (K, TM) bf16   w: (Cout, K) bf16   b: (Cout, 1) f32   o: (Cout, TM)
    acc = jnp.dot(w_ref[...], p_ref[...], preferred_element_type=jnp.float32)
    acc = acc + b_ref[...]
    if relu:
        acc = jnp.maximum(acc, 0.0)
    o_ref[...] = acc.astype(o_ref.dtype)


def _dec_cls_kernel(pa_ref, pb_ref, wa_ref, wb_ref, db_ref, cw_ref, cb_ref, o_ref):
    # Fused decoder 3x3 conv over the virtual concat [f2_up, f1] (+bias, ReLU)
    # followed by the 1x1 classifier, all on the resident lane tile.
    acc = jnp.dot(wa_ref[...], pa_ref[...], preferred_element_type=jnp.float32)
    acc = acc + jnp.dot(wb_ref[...], pb_ref[...], preferred_element_type=jnp.float32)
    dec = jnp.maximum(acc + db_ref[...], 0.0)                         # (Cd, TM) f32
    logits = jnp.dot(cw_ref[...], dec.astype(jnp.bfloat16),           # bf16 MXU pass
                     preferred_element_type=jnp.float32)
    o_ref[...] = (logits + cb_ref[...]).astype(o_ref.dtype)


def _resize_kernel(x_ref, wwT_ref, wh_ref, o_ref, *, group):
    # Separable bilinear resize, `group` planes per grid step:
    #   out = Wh @ X @ WwT   (bf16 operands, f32 accumulation)
    wwT = wwT_ref[...]
    wh = wh_ref[...]
    for g in range(group):                                            # static unroll
        tmp = jnp.dot(x_ref[g], wwT, preferred_element_type=jnp.float32)
        o_ref[g] = jnp.dot(wh, tmp.astype(jnp.bfloat16),
                           preferred_element_type=jnp.float32).astype(o_ref.dtype)


# ----------------------------------------------------------------------------
# Glue: transposed im2col (bf16, K ordered (ci, ki, kj) to match OIHW weights)
# ----------------------------------------------------------------------------
def _im2col_T(x, kh, kw, stride, pad, *, channels_first):
    """x: (C,B,H,W) if channels_first else (B,C,H,W)  ->  (K=(c,ki,kj), M=(b,ho,wo)) bf16."""
    x = x.astype(jnp.bfloat16)                       # cast BEFORE extraction
    if channels_first:
        C, B, H, W = x.shape
    else:
        B, C, H, W = x.shape
    xp = jnp.pad(x, ((0, 0), (0, 0), (pad, pad), (pad, pad)))
    Ho = (H + 2 * pad - kh) // stride + 1
    Wo = (W + 2 * pad - kw) // stride + 1
    cols = []
    for i in range(kh):
        for j in range(kw):
            cols.append(xp[:, :, i:i + (Ho - 1) * stride + 1:stride,
                              j:j + (Wo - 1) * stride + 1:stride])
    pat = jnp.stack(cols, axis=0)                    # (kh*kw, A0, A1, Ho, Wo)
    if channels_first:                               # (tap, C, B, ...) -> (C, tap, B, ...)
        pat = jnp.transpose(pat, (1, 0, 2, 3, 4))
    else:                                            # (tap, B, C, ...) -> (C, tap, B, ...)
        pat = jnp.transpose(pat, (2, 0, 1, 3, 4))
    return pat.reshape(C * kh * kw, B * Ho * Wo), Ho, Wo


# ----------------------------------------------------------------------------
# Wrappers
# ----------------------------------------------------------------------------
def conv2d(x, w_oihw, b, *, stride, pad, relu, channels_first, out_dtype=jnp.bfloat16):
    """Conv2d via transposed im2col + lane-dense Pallas matmul.

    x: (Cin,B,H,W) CF or (B,Cin,H,W) NCHW; w: (Cout,Cin,kh,kw) OIHW; b: (Cout,)
    returns (Cout, B, Ho, Wo) in channel-first layout."""
    Cout, Cin, kh, kw = w_oihw.shape
    pT, Ho, Wo = _im2col_T(x, kh, kw, stride, pad, channels_first=channels_first)
    K, M = pT.shape
    B = M // (Ho * Wo)
    tm = _choose_tm(M)
    Mpad = _round_up(M, tm)
    if Mpad != M:
        pT = jnp.pad(pT, ((0, 0), (0, Mpad - M)))
    w2 = w_oihw.reshape(Cout, K).astype(jnp.bfloat16)
    b2 = b.reshape(Cout, 1).astype(jnp.float32)

    out = pl.pallas_call(
        functools.partial(_convT_kernel, relu=relu),
        out_shape=jax.ShapeDtypeStruct((Cout, Mpad), out_dtype),
        grid=(Mpad // tm,),
        in_specs=[
            pl.BlockSpec((K, tm), lambda m: (0, m)),      # patches: tiled over M
            pl.BlockSpec((Cout, K), lambda m: (0, 0)),    # weights: grid-invariant
            pl.BlockSpec((Cout, 1), lambda m: (0, 0)),    # bias
        ],
        out_specs=pl.BlockSpec((Cout, tm), lambda m: (0, m)),
        compiler_params=pltpu.CompilerParams(
            dimension_semantics=("parallel",),
            vmem_limit_bytes=_VMEM_LIMIT),
    )(pT, w2, b2)
    return out[:, :M].reshape(Cout, B, Ho, Wo)


def decoder_cls_cf(fa_cf, fb_cf, dec_w, dec_b, cls_w, cls_b, out_dtype=jnp.bfloat16):
    """Fused decoder 3x3 conv over virtual concat [fa, fb] + ReLU + 1x1 classifier.

    fa_cf/fb_cf: (C,B,H,W); dec_w: (Cd, Ca+Cb, 3, 3) OIHW; cls_w: (ncls, Cd, 1, 1)."""
    Ca, B, H, W = fa_cf.shape
    Cb = fb_cf.shape[0]
    Cd = dec_w.shape[0]
    ncls = cls_w.shape[0]

    pa, Ho, Wo = _im2col_T(fa_cf, 3, 3, 1, 1, channels_first=True)
    pb, _, _ = _im2col_T(fb_cf, 3, 3, 1, 1, channels_first=True)
    Ka, M = pa.shape
    Kb = pb.shape[0]
    tm = _choose_tm(M)
    Mpad = _round_up(M, tm)
    if Mpad != M:
        pa = jnp.pad(pa, ((0, 0), (0, Mpad - M)))
        pb = jnp.pad(pb, ((0, 0), (0, Mpad - M)))

    wa = dec_w[:, :Ca].reshape(Cd, Ka).astype(jnp.bfloat16)
    wb = dec_w[:, Ca:].reshape(Cd, Kb).astype(jnp.bfloat16)
    cw = cls_w.reshape(ncls, Cd).astype(jnp.bfloat16)

    out = pl.pallas_call(
        _dec_cls_kernel,
        out_shape=jax.ShapeDtypeStruct((ncls, Mpad), out_dtype),
        grid=(Mpad // tm,),
        in_specs=[
            pl.BlockSpec((Ka, tm), lambda m: (0, m)),
            pl.BlockSpec((Kb, tm), lambda m: (0, m)),
            pl.BlockSpec((Cd, Ka), lambda m: (0, 0)),
            pl.BlockSpec((Cd, Kb), lambda m: (0, 0)),
            pl.BlockSpec((Cd, 1), lambda m: (0, 0)),
            pl.BlockSpec((ncls, Cd), lambda m: (0, 0)),
            pl.BlockSpec((ncls, 1), lambda m: (0, 0)),
        ],
        out_specs=pl.BlockSpec((ncls, tm), lambda m: (0, m)),
        compiler_params=pltpu.CompilerParams(
            dimension_semantics=("parallel",),
            vmem_limit_bytes=_VMEM_LIMIT),
    )(pa, pb, wa, wb, dec_b.reshape(Cd, 1).astype(jnp.float32),
      cw, cls_b.reshape(ncls, 1).astype(jnp.float32))
    return out[:, :M].reshape(ncls, B, Ho, Wo)


def _bilinear_matrix(out_size, in_size):
    """Row-stochastic 1-D interpolation matrix, align_corners=True semantics."""
    if out_size == 1 or in_size == 1:
        w = jnp.zeros((out_size, in_size), jnp.float32)
        return w.at[:, 0].set(1.0)
    pos = jnp.arange(out_size, dtype=jnp.float32) * (in_size - 1) / (out_size - 1)
    lo = jnp.clip(jnp.floor(pos).astype(jnp.int32), 0, in_size - 2)
    frac = pos - lo.astype(jnp.float32)
    rows = jnp.arange(out_size)
    w = jnp.zeros((out_size, in_size), jnp.float32)
    w = w.at[rows, lo].add(1.0 - frac)
    w = w.at[rows, lo + 1].add(frac)
    return w


def bilinear_resize_planes(x_planes, Hout, Wout, out_dtype=jnp.float32):
    """Separable bilinear resize (align_corners=True) of (P, Hin, Win) planes.

    One Pallas kernel per `group` planes: out = Wh @ X @ WwT inside the block,
    grid over planes marked 'parallel'.  No kron matrix, no HBM intermediate,
    VMEM per step is O(plane), so it stays bounded on v7x's 64 MiB."""
    P, Hin, Win = x_planes.shape
    wh = _bilinear_matrix(Hout, Hin).astype(jnp.bfloat16)                 # (Hout, Hin)
    wwT = jnp.transpose(_bilinear_matrix(Wout, Win)).astype(jnp.bfloat16)  # (Win, Wout)
    G = _choose_plane_group(P)

    out = pl.pallas_call(
        functools.partial(_resize_kernel, group=G),
        out_shape=jax.ShapeDtypeStruct((P, Hout, Wout), out_dtype),
        grid=(P // G,),
        in_specs=[
            pl.BlockSpec((G, Hin, Win), lambda p: (p, 0, 0)),
            pl.BlockSpec((Win, Wout), lambda p: (0, 0)),
            pl.BlockSpec((Hout, Hin), lambda p: (0, 0)),
        ],
        out_specs=pl.BlockSpec((G, Hout, Wout), lambda p: (p, 0, 0)),
        compiler_params=pltpu.CompilerParams(
            dimension_semantics=("parallel",),
            vmem_limit_bytes=_VMEM_LIMIT),
    )(x_planes.astype(jnp.bfloat16), wwT, wh)
    return out


# ----------------------------------------------------------------------------
# Synthetic model params (deterministic, OIHW = PyTorch conv layout)
# ----------------------------------------------------------------------------
def init_params(key, cin=4, num_classes=3):
    ks = jax.random.split(key, 8)
    p = {}
    p["enc1_w"] = 0.1 * jax.random.normal(ks[0], (8, cin, 3, 3), jnp.float32)
    p["enc1_b"] = 0.01 * jax.random.normal(ks[1], (8,), jnp.float32)
    p["enc2_w"] = 0.1 * jax.random.normal(ks[2], (16, 8, 3, 3), jnp.float32)
    p["enc2_b"] = 0.01 * jax.random.normal(ks[3], (16,), jnp.float32)
    p["dec_w"] = 0.1 * jax.random.normal(ks[4], (16, 24, 3, 3), jnp.float32)
    p["dec_b"] = 0.01 * jax.random.normal(ks[5], (16,), jnp.float32)
    p["cls_w"] = 0.1 * jax.random.normal(ks[6], (num_classes, 16, 1, 1), jnp.float32)
    p["cls_b"] = 0.01 * jax.random.normal(ks[7], (num_classes,), jnp.float32)
    return p


# ----------------------------------------------------------------------------
# Forward pass (== ModelDebugWrapper.forward of the synthetic model)
# ----------------------------------------------------------------------------
@jax.jit
def model_debug_forward(x_nchw, params):
    B, C, H, W = x_nchw.shape

    # encoder (NCHW consumed directly; features kept channel-first, stored bf16)
    f1 = conv2d(x_nchw, params["enc1_w"], params["enc1_b"], stride=2, pad=1,
                relu=True, channels_first=False)                      # (8,B,H/2,W/2)
    f2 = conv2d(f1, params["enc2_w"], params["enc2_b"], stride=2, pad=1,
                relu=True, channels_first=True)                       # (16,B,H/4,W/4)

    # decoder: bilinear x2 upsample of deepest feature, virtual concat with skip,
    # fused 3x3 conv + ReLU + 1x1 classifier in one kernel.
    C2, _, H2, W2 = f2.shape
    H1, W1 = f1.shape[2], f1.shape[3]
    f2_up = bilinear_resize_planes(f2.reshape(C2 * B, H2, W2), H1, W1,
                                   out_dtype=jnp.bfloat16).reshape(C2, B, H1, W1)
    logits = decoder_cls_cf(f2_up, f1, params["dec_w"], params["dec_b"],
                            params["cls_w"], params["cls_b"])          # (ncls,B,H1,W1)
    ncls = logits.shape[0]

    # F.interpolate(..., size=(H,W), mode='bilinear', align_corners=True).
    # The tiny low-res logits are transposed so the full-resolution output is
    # written directly in NCHW (no post-resize transpose pass over the big tensor).
    lg = jnp.transpose(logits, (1, 0, 2, 3)).reshape(B * ncls, H1, W1)
    out = bilinear_resize_planes(lg, H, W, out_dtype=jnp.float32)      # (B*ncls,H,W)
    return out.reshape(B, ncls, H, W)                                  # NCHW


if __name__ == "__main__":
    key = jax.random.PRNGKey(0)
    kx, kp = jax.random.split(key)

    B, C, H, W = 2, 4, 16, 16
    x = jax.random.normal(kx, (B, C, H, W), jnp.float32)
    params = init_params(kp, cin=C, num_classes=3)

    out = model_debug_forward(x, params)
    out = jax.block_until_ready(out)

    assert out.shape == (B, 3, H, W), out.shape
    assert out.dtype == jnp.float32
    assert bool(jnp.all(jnp.isfinite(out)))
    print("KERNEL_OK")
</pallas_src>

<mosaic_0001>
module attributes {stable_mosaic.version = 11 : i64} {
  func.func private @main(%arg0: i32) attributes {dimension_semantics = [#tpu.dimension_semantics<core_parallel>], iteration_bounds = array<i64: 2>, tpu.core_type = #tpu.core_type<sc_scalar_subcore>, window_params = []} {
    return
  }
}

module attributes {stable_mosaic.version = 11 : i64} {
  func.func private @main(%arg0: i32) attributes {dimension_semantics = [#tpu.dimension_semantics<core_parallel>], iteration_bounds = array<i64: 2>, tpu.core_type = #tpu.core_type<sc_scalar_subcore>, window_params = []} {
    return
  }
}

module attributes {stable_mosaic.version = 11 : i64} {
  func.func @_convT_kernel(%arg0: i32, %arg1: memref<36x128xbf16, #tpu.memory_space<vmem>>, %arg2: memref<8x36xbf16, #tpu.memory_space<vmem>>, %arg3: memref<8x1xf32, #tpu.memory_space<vmem>>, %arg4: memref<8x128xbf16, #tpu.memory_space<vmem>>) attributes {dimension_semantics = [#tpu.dimension_semantics<parallel>], iteration_bounds = array<i64: 1>, scalar_prefetch = 0 : i64, scratch_operands = 0 : i64, tpu.core_type = #tpu.core_type<tc>, window_params = [{transform_indices = @transform_0, window_bounds = array<i64: 36, 128>}, {pipeline_mode = #tpu.pipeline_mode<synchronous>, transform_indices = @transform_1, window_bounds = array<i64: 8, 36>}, {pipeline_mode = #tpu.pipeline_mode<synchronous>, transform_indices = @transform_2, window_bounds = array<i64: 8, 1>}, {transform_indices = @transform_3, window_bounds = array<i64: 8, 128>}]} {
    %c0 = arith.constant 0 : index
    %c0_0 = arith.constant 0 : index
    %0 = vector.load %arg2[%c0, %c0_0] : memref<8x36xbf16, #tpu.memory_space<vmem>>, vector<8x36xbf16>
    %c0_1 = arith.constant 0 : index
    %c0_2 = arith.constant 0 : index
    %1 = vector.load %arg1[%c0_1, %c0_2] : memref<36x128xbf16, #tpu.memory_space<vmem>>, vector<36x128xbf16>
    %cst = arith.constant dense<0.000000e+00> : vector<8x128xf32>
    %2 = tpu.matmul %0, %1, %cst {dimension_numbers = #tpu.dot_dimension_numbers<[1], [0], [0], [1], [0, 0, 1, 1], [], []>} : vector<8x36xbf16>, vector<36x128xbf16>, vector<8x128xf32> -> vector<8x128xf32>
    %c0_3 = arith.constant 0 : index
    %c0_4 = arith.constant 0 : index
    %3 = vector.load %arg3[%c0_3, %c0_4] : memref<8x1xf32, #tpu.memory_space<vmem>>, vector<8x1xf32>
    %4 = vector.broadcast %3 : vector<8x1xf32> to vector<8x128xf32>
    %5 = arith.addf %2, %4 : vector<8x128xf32>
    %cst_5 = arith.constant 0.000000e+00 : f32
    %6 = vector.broadcast %cst_5 : f32 to vector<8x128xf32>
    %7 = arith.maximumf %5, %6 : vector<8x128xf32>
    %8 = arith.truncf %7 : vector<8x128xf32> to vector<8x128xbf16>
    %c0_6 = arith.constant 0 : index
    %c0_7 = arith.constant 0 : index
    %9 = vector.load %arg4[%c0_6, %c0_7] : memref<8x128xbf16, #tpu.memory_space<vmem>>, vector<8x128xbf16>
    tpu.vector_store %arg4[%c0_6, %c0_7], %8 {strides = array<i32>} : memref<8x128xbf16, #tpu.memory_space<vmem>>, vector<8x128xbf16>,
    return
  }
  func.func @transform_0(%arg0: i32) -> (i32, i32) {
    %c0_i32 = arith.constant 0 : i32
    %c0_i32_0 = arith.constant 0 : i32
    return %c0_i32, %arg0 : i32, i32
  }
  func.func @transform_1(%arg0: i32) -> (i32, i32) {
    %c0_i32 = arith.constant 0 : i32
    %c0_i32_0 = arith.constant 0 : i32
    %c0_i32_1 = arith.constant 0 : i32
    return %c0_i32, %c0_i32_0 : i32, i32
  }
  func.func @transform_2(%arg0: i32) -> (i32, i32) {
    %c0_i32 = arith.constant 0 : i32
    %c0_i32_0 = arith.constant 0 : i32
    %c0_i32_1 = arith.constant 0 : i32
    return %c0_i32, %c0_i32_0 : i32, i32
  }
  func.func @transform_3(%arg0: i32) -> (i32, i32) {
    %c0_i32 = arith.constant 0 : i32
    %c0_i32_0 = arith.constant 0 : i32
    return %c0_i32, %arg0 : i32, i32
  }
}

module attributes {stable_mosaic.version = 11 : i64} {
  func.func @_convT_kernel(%arg0: i32, %arg1: memref<72x128xbf16, #tpu.memory_space<vmem>>, %arg2: memref<16x72xbf16, #tpu.memory_space<vmem>>, %arg3: memref<16x1xf32, #tpu.memory_space<vmem>>, %arg4: memref<16x128xbf16, #tpu.memory_space<vmem>>) attributes {dimension_semantics = [#tpu.dimension_semantics<parallel>], iteration_bounds = array<i64: 1>, scalar_prefetch = 0 : i64, scratch_operands = 0 : i64, tpu.core_type = #tpu.core_type<tc>, window_params = [{transform_indices = @transform_0, window_bounds = array<i64: 72, 128>}, {pipeline_mode = #tpu.pipeline_mode<synchronous>, transform_indices = @transform_1, window_bounds = array<i64: 16, 72>}, {pipeline_mode = #tpu.pipeline_mode<synchronous>, transform_indices = @transform_2, window_bounds = array<i64: 16, 1>}, {transform_indices = @transform_3, window_bounds = array<i64: 16, 128>}]} {
    %c0 = arith.constant 0 : index
    %c0_0 = arith.constant 0 : index
    %0 = vector.load %arg2[%c0, %c0_0] : memref<16x72xbf16, #tpu.memory_space<vmem>>, vector<16x72xbf16>
    %c0_1 = arith.constant 0 : index
    %c0_2 = arith.constant 0 : index
    %1 = vector.load %arg1[%c0_1, %c0_2] : memref<72x128xbf16, #tpu.memory_space<vmem>>, vector<72x128xbf16>
    %cst = arith.constant dense<0.000000e+00> : vector<16x128xf32>
    %2 = tpu.matmul %0, %1, %cst {dimension_numbers = #tpu.dot_dimension_numbers<[1], [0], [0], [1], [0, 0, 1, 1], [], []>} : vector<16x72xbf16>, vector<72x128xbf16>, vector<16x128xf32> -> vector<16x128xf32>
    %c0_3 = arith.constant 0 : index
    %c0_4 = arith.constant 0 : index
    %3 = vector.load %arg3[%c0_3, %c0_4] : memref<16x1xf32, #tpu.memory_space<vmem>>, vector<16x1xf32>
    %4 = vector.broadcast %3 : vector<16x1xf32> to vector<16x128xf32>
    %5 = arith.addf %2, %4 : vector<16x128xf32>
    %cst_5 = arith.constant 0.000000e+00 : f32
    %6 = vector.broadcast %cst_5 : f32 to vector<16x128xf32>
    %7 = arith.maximumf %5, %6 : vector<16x128xf32>
    %8 = arith.truncf %7 : vector<16x128xf32> to vector<16x128xbf16>
    %c0_6 = arith.constant 0 : index
    %c0_7 = arith.constant 0 : index
    %9 = vector.load %arg4[%c0_6, %c0_7] : memref<16x128xbf16, #tpu.memory_space<vmem>>, vector<16x128xbf16>
    tpu.vector_store %arg4[%c0_6, %c0_7], %8 {strides = array<i32>} : memref<16x128xbf16, #tpu.memory_space<vmem>>, vector<16x128xbf16>,
    return
  }
  func.func @transform_0(%arg0: i32) -> (i32, i32) {
    %c0_i32 = arith.constant 0 : i32
    %c0_i32_0 = arith.constant 0 : i32
    return %c0_i32, %arg0 : i32, i32
  }
  func.func @transform_1(%arg0: i32) -> (i32, i32) {
    %c0_i32 = arith.constant 0 : i32
    %c0_i32_0 = arith.constant 0 : i32
    %c0_i32_1 = arith.constant 0 : i32
    return %c0_i32, %c0_i32_0 : i32, i32
  }
  func.func @transform_2(%arg0: i32) -> (i32, i32) {
    %c0_i32 = arith.constant 0 : i32
    %c0_i32_0 = arith.constant 0 : i32
    %c0_i32_1 = arith.constant 0 : i32
    return %c0_i32, %c0_i32_0 : i32, i32
  }
  func.func @transform_3(%arg0: i32) -> (i32, i32) {
    %c0_i32 = arith.constant 0 : i32
    %c0_i32_0 = arith.constant 0 : i32
    return %c0_i32, %arg0 : i32, i32
  }
}

module attributes {stable_mosaic.version = 11 : i64} {
  func.func @_resize_kernel(%arg0: i32, %arg1: memref<8x4x4xbf16, #tpu.memory_space<vmem>>, %arg2: memref<4x8xbf16, #tpu.memory_space<vmem>>, %arg3: memref<8x4xbf16, #tpu.memory_space<vmem>>, %arg4: memref<8x8x8xbf16, #tpu.memory_space<vmem>>) attributes {dimension_semantics = [#tpu.dimension_semantics<parallel>], iteration_bounds = array<i64: 4>, scalar_prefetch = 0 : i64, scratch_operands = 0 : i64, tpu.core_type = #tpu.core_type<tc>, window_params = [{transform_indices = @transform_0, window_bounds = array<i64: 8, 4, 4>}, {pipeline_mode = #tpu.pipeline_mode<synchronous>, transform_indices = @transform_1, window_bounds = array<i64: 4, 8>}, {pipeline_mode = #tpu.pipeline_mode<synchronous>, transform_indices = @transform_2, window_bounds = array<i64: 8, 4>}, {transform_indices = @transform_3, window_bounds = array<i64: 8, 8, 8>}]} {
    %c0 = arith.constant 0 : index
    %c0_0 = arith.constant 0 : index
    %0 = vector.load %arg2[%c0, %c0_0] : memref<4x8xbf16, #tpu.memory_space<vmem>>, vector<4x8xbf16>
    %c0_1 = arith.constant 0 : index
    %c0_2 = arith.constant 0 : index
    %1 = vector.load %arg3[%c0_1, %c0_2] : memref<8x4xbf16, #tpu.memory_space<vmem>>, vector<8x4xbf16>
    %c0_3 = arith.constant 0 : index
    %c0_4 = arith.constant 0 : index
    %c0_5 = arith.constant 0 : index
    %2 = vector.load %arg1[%c0_3, %c0_4, %c0_5] : memref<8x4x4xbf16, #tpu.memory_space<vmem>>, vector<1x4x4xbf16>
    %3 = vector.shape_cast %2 : vector<1x4x4xbf16> to vector<4x4xbf16>
    %cst = arith.constant dense<0.000000e+00> : vector<4x8xf32>
    %4 = tpu.matmul %3, %0, %cst {dimension_numbers = #tpu.dot_dimension_numbers<[1], [0], [0], [1], [0, 0, 1, 1], [], []>} : vector<4x4xbf16>, vector<4x8xbf16>, vector<4x8xf32> -> vector<4x8xf32>
    %5 = arith.truncf %4 : vector<4x8xf32> to vector<4x8xbf16>
    %cst_6 = arith.constant dense<0.000000e+00> : vector<8x8xf32>
    %6 = tpu.matmul %1, %5, %cst_6 {dimension_numbers = #tpu.dot_dimension_numbers<[1], [0], [0], [1], [0, 0, 1, 1], [], []>} : vector<8x4xbf16>, vector<4x8xbf16>, vector<8x8xf32> -> vector<8x8xf32>
    %7 = arith.truncf %6 : vector<8x8xf32> to vector<8x8xbf16>
    %c0_7 = arith.constant 0 : index
    %c0_8 = arith.constant 0 : index
    %c0_9 = arith.constant 0 : index
    %8 = vector.load %arg4[%c0_7, %c0_8, %c0_9] : memref<8x8x8xbf16, #tpu.memory_space<vmem>>, vector<1x8x8xbf16>
    %9 = vector.shape_cast %8 : vector<1x8x8xbf16> to vector<8x8xbf16>
    %10 = vector.shape_cast %7 : vector<8x8xbf16> to vector<1x8x8xbf16>
    tpu.vector_store %arg4[%c0_7, %c0_8, %c0_9], %10 {strides = array<i32>} : memref<8x8x8xbf16, #tpu.memory_space<vmem>>, vector<1x8x8xbf16>,
    %c1 = arith.constant 1 : index
    %c0_10 = arith.constant 0 : index
    %c0_11 = arith.constant 0 : index
    %11 = vector.load %arg1[%c1, %c0_10, %c0_11] : memref<8x4x4xbf16, #tpu.memory_space<vmem>>, vector<1x4x4xbf16>
    %12 = vector.shape_cast %11 : vector<1x4x4xbf16> to vector<4x4xbf16>
    %cst_12 = arith.constant dense<0.000000e+00> : vector<4x8xf32>
    %13 = tpu.matmul %12, %0, %cst_12 {dimension_numbers = #tpu.dot_dimension_numbers<[1], [0], [0], [1], [0, 0, 1, 1], [], []>} : vector<4x4xbf16>, vector<4x8xbf16>, vector<4x8xf32> -> vector<4x8xf32>
    %14 = arith.truncf %13 : vector<4x8xf32> to vector<4x8xbf16>
    %cst_13 = arith.constant dense<0.000000e+00> : vector<8x8xf32>
    %15 = tpu.matmul %1, %14, %cst_13 {dimension_numbers = #tpu.dot_dimension_numbers<[1], [0], [0], [1], [0, 0, 1, 1], [], []>} : vector<8x4xbf16>, vector<4x8xbf16>, vector<8x8xf32> -> vector<8x8xf32>
    %16 = arith.truncf %15 : vector<8x8xf32> to vector<8x8xbf16>
    %c1_14 = arith.constant 1 : index
    %c0_15 = arith.constant 0 : index
    %c0_16 = arith.constant 0 : index
    %17 = vector.load %arg4[%c1_14, %c0_15, %c0_16] : memref<8x8x8xbf16, #tpu.memory_space<vmem>>, vector<1x8x8xbf16>
    %18 = vector.shape_cast %17 : vector<1x8x8xbf16> to vector<8x8xbf16>
    %19 = vector.shape_cast %16 : vector<8x8xbf16> to vector<1x8x8xbf16>
    tpu.vector_store %arg4[%c1_14, %c0_15, %c0_16], %19 {strides = array<i32>} : memref<8x8x8xbf16, #tpu.memory_space<vmem>>, vector<1x8x8xbf16>,
    %c2 = arith.constant 2 : index
    %c0_17 = arith.constant 0 : index
    %c0_18 = arith.constant 0 : index
    %20 = vector.load %arg1[%c2, %c0_17, %c0_18] : memref<8x4x4xbf16, #tpu.memory_space<vmem>>, vector<1x4x4xbf16>
    %21 = vector.shape_cast %20 : vector<1x4x4xbf16> to vector<4x4xbf16>
    %cst_19 = arith.constant dense<0.000000e+00> : vector<4x8xf32>
    %22 = tpu.matmul %21, %0, %cst_19 {dimension_numbers = #tpu.dot_dimension_numbers<[1], [0], [0], [1], [0, 0, 1, 1], [], []>} : vector<4x4xbf16>, vector<4x8xbf16>, vector<4x8xf32> -> vector<4x8xf32>
    %23 = arith.truncf %22 : vector<4x8xf32> to vector<4x8xbf16>
    %cst_20 = arith.constant dense<0.000000e+00> : vector<8x8xf32>
    %24 = tpu.matmul %1, %23, %cst_20 {dimension_numbers = #tpu.dot_dimension_numbers<[1], [0], [0], [1], [0, 0, 1, 1], [], []>} : vector<8x4xbf16>, vector<4x8xbf16>, vector<8x8xf32> -> vector<8x8xf32>
    %25 = arith.truncf %24 : vector<8x8xf32> to vector<8x8xbf16>
    %c2_21 = arith.constant 2 : index
    %c0_22 = arith.constant 0 : index
    %c0_23 = arith.constant 0 : index
    %26 = vector.load %arg4[%c2_21, %c0_22, %c0_23] : memref<8x8x8xbf16, #tpu.memory_space<vmem>>, vector<1x8x8xbf16>
    %27 = vector.shape_cast %26 : vector<1x8x8xbf16> to vector<8x8xbf16>
    %28 = vector.shape_cast %25 : vector<8x8xbf16> to vector<1x8x8xbf16>
    tpu.vector_store %arg4[%c2_21, %c0_22, %c0_23], %28 {strides = array<i32>} : memref<8x8x8xbf16, #tpu.memory_space<vmem>>, vector<1x8x8xbf16>,
    %c3 = arith.constant 3 : index
    %c0_24 = arith.constant 0 : index
    %c0_25 = arith.constant 0 : index
    %29 = vector.load %arg1[%c3, %c0_24, %c0_25] : memref<8x4x4xbf16, #tpu.memory_space<vmem>>, vector<1x4x4xbf16>
    %30 = vector.shape_cast %29 : vector<1x4x4xbf16> to vector<4x4xbf16>
    %cst_26 = arith.constant dense<0.000000e+00> : vector<4x8xf32>
    %31 = tpu.matmul %30, %0, %cst_26 {dimension_numbers = #tpu.dot_dimension_numbers<[1], [0], [0], [1], [0, 0, 1, 1], [], []>} : vector<4x4xbf16>, vector<4x8xbf16>, vector<4x8xf32> -> vector<4x8xf32>
    %32 = arith.truncf %31 : vector<4x8xf32> to vector<4x8xbf16>
    %cst_27 = arith.constant dense<0.000000e+00> : vector<8x8xf32>
    %33 = tpu.matmul %1, %32, %cst_27 {dimension_numbers = #tpu.dot_dimension_numbers<[1], [0], [0], [1], [0, 0, 1, 1], [], []>} : vector<8x4xbf16>, vector<4x8xbf16>, vector<8x8xf32> -> vector<8x8xf32>
    %34 = arith.truncf %33 : vector<8x8xf32> to vector<8x8xbf16>
    %c3_28 = arith.constant 3 : index
    %c0_29 = arith.constant 0 : index
    %c0_30 = arith.constant 0 : index
    %35 = vector.load %arg4[%c3_28, %c0_29, %c0_30] : memref<8x8x8xbf16, #tpu.memory_space<vmem>>, vector<1x8x8xbf16>
    %36 = vector.shape_cast %35 : vector<1x8x8xbf16> to vector<8x8xbf16>
    %37 = vector.shape_cast %34 : vector<8x8xbf16> to vector<1x8x8xbf16>
    tpu.vector_store %arg4[%c3_28, %c0_29, %c0_30], %37 {strides = array<i32>} : memref<8x8x8xbf16, #tpu.memory_space<vmem>>, vector<1x8x8xbf16>,
    %c4 = arith.constant 4 : index
    %c0_31 = arith.constant 0 : index
    %c0_32 = arith.constant 0 : index
    %38 = vector.load %arg1[%c4, %c0_31, %c0_32] : memref<8x4x4xbf16, #tpu.memory_space<vmem>>, vector<1x4x4xbf16>
    %39 = vector.shape_cast %38 : vector<1x4x4xbf16> to vector<4x4xbf16>
    %cst_33 = arith.constant dense<0.000000e+00> : vector<4x8xf32>
    %40 = tpu.matmul %39, %0, %cst_33 {dimension_numbers = #tpu.dot_dimension_numbers<[1], [0], [0], [1], [0, 0, 1, 1], [], []>} : vector<4x4xbf16>, vector<4x8xbf16>, vector<4x8xf32> -> vector<4x8xf32>
    %41 = arith.truncf %40 : vector<4x8xf32> to vector<4x8xbf16>
    %cst_34 = arith.constant dense<0.000000e+00> : vector<8x8xf32>
    %42 = tpu.matmul %1, %41, %cst_34 {dimension_numbers = #tpu.dot_dimension_numbers<[1], [0], [0], [1], [0, 0, 1, 1], [], []>} : vector<8x4xbf16>, vector<4x8xbf16>, vector<8x8xf32> -> vector<8x8xf32>
    %43 = arith.truncf %42 : vector<8x8xf32> to vector<8x8xbf16>
    %c4_35 = arith.constant 4 : index
    %c0_36 = arith.constant 0 : index
    %c0_37 = arith.constant 0 : index
    %44 = vector.load %arg4[%c4_35, %c0_36, %c0_37] : memref<8x8x8xbf16, #tpu.memory_space<vmem>>, vector<1x8x8xbf16>
    %45 = vector.shape_cast %44 : vector<1x8x8xbf16> to vector<8x8xbf16>
    %46 = vector.shape_cast %43 : vector<8x8xbf16> to vector<1x8x8xbf16>
    tpu.vector_store %arg4[%c4_35, %c0_36, %c0_37], %46 {strides = array<i32>} : memref<8x8x8xbf16, #tpu.memory_space<vmem>>, vector<1x8x8xbf16>,
    %c5 = arith.constant 5 : index
    %c0_38 = arith.constant 0 : index
    %c0_39 = arith.constant 0 : index
    %47 = vector.load %arg1[%c5, %c0_38, %c0_39] : memref<8x4x4xbf16, #tpu.memory_space<vmem>>, vector<1x4x4xbf16>
    %48 = vector.shape_cast %47 : vector<1x4x4xbf16> to vector<4x4xbf16>
    %cst_40 = arith.constant dense<0.000000e+00> : vector<4x8xf32>
    %49 = tpu.matmul %48, %0, %cst_40 {dimension_numbers = #tpu.dot_dimension_numbers<[1], [0], [0], [1], [0, 0, 1, 1], [], []>} : vector<4x4xbf16>, vector<4x8xbf16>, vector<4x8xf32> -> vector<4x8xf32>
    %50 = arith.truncf %49 : vector<4x8xf32> to vector<4x8xbf16>
    %cst_41 = arith.constant dense<0.000000e+00> : vector<8x8xf32>
    %51 = tpu.matmul %1, %50, %cst_41 {dimension_numbers = #tpu.dot_dimension_numbers<[1], [0], [0], [1], [0, 0, 1, 1], [], []>} : vector<8x4xbf16>, vector<4x8xbf16>, vector<8x8xf32> -> vector<8x8xf32>
    %52 = arith.truncf %51 : vector<8x8xf32> to vector<8x8xbf16>
    %c5_42 = arith.constant 5 : index
    %c0_43 = arith.constant 0 : index
    %c0_44 = arith.constant 0 : index
    %53 = vector.load %arg4[%c5_42, %c0_43, %c0_44] : memref<8x8x8xbf16, #tpu.memory_space<vmem>>, vector<1x8x8xbf16>
    %54 = vector.shape_cast %53 : vector<1x8x8xbf16> to vector<8x8xbf16>
    %55 = vector.shape_cast %52 : vector<8x8xbf16> to vector<1x8x8xbf16>
    tpu.vector_store %arg4[%c5_42, %c0_43, %c0_44], %55 {strides = array<i32>} : memref<8x8x8xbf16, #tpu.memory_space<vmem>>, vector<1x8x8xbf16>,
    %c6 = arith.constant 6 : index
    %c0_45 = arith.constant 0 : index
    %c0_46 = arith.constant 0 : index
    %56 = vector.load %arg1[%c6, %c0_45, %c0_46] : memref<8x4x4xbf16, #tpu.memory_space<vmem>>, vector<1x4x4xbf16>
    %57 = vector.shape_cast %56 : vector<1x4x4xbf16> to vector<4x4xbf16>
    %cst_47 = arith.constant dense<0.000000e+00> : vector<4x8xf32>
    %58 = tpu.matmul %57, %0, %cst_47 {dimension_numbers = #tpu.dot_dimension_numbers<[1], [0], [0], [1], [0, 0, 1, 1], [], []>} : vector<4x4xbf16>, vector<4x8xbf16>, vector<4x8xf32> -> vector<4x8xf32>
    %59 = arith.truncf %58 : vector<4x8xf32> to vector<4x8xbf16>
    %cst_48 = arith.constant dense<0.000000e+00> : vector<8x8xf32>
    %60 = tpu.matmul %1, %59, %cst_48 {dimension_numbers = #tpu.dot_dimension_numbers<[1], [0], [0], [1], [0, 0, 1, 1], [], []>} : vector<8x4xbf16>, vector<4x8xbf16>, vector<8x8xf32> -> vector<8x8xf32>
    %61 = arith.truncf %60 : vector<8x8xf32> to vector<8x8xbf16>
    %c6_49 = arith.constant 6 : index
    %c0_50 = arith.constant 0 : index
    %c0_51 = arith.constant 0 : index
    %62 = vector.load %arg4[%c6_49, %c0_50, %c0_51] : memref<8x8x8xbf16, #tpu.memory_space<vmem>>, vector<1x8x8xbf16>
    %63 = vector.shape_cast %62 : vector<1x8x8xbf16> to vector<8x8xbf16>
    %64 = vector.shape_cast %61 : vector<8x8xbf16> to vector<1x8x8xbf16>
    tpu.vector_store %arg4[%c6_49, %c0_50, %c0_51], %64 {strides = array<i32>} : memref<8x8x8xbf16, #tpu.memory_space<vmem>>, vector<1x8x8xbf16>,
    %c7 = arith.constant 7 : index
    %c0_52 = arith.constant 0 : index
    %c0_53 = arith.constant 0 : index
    %65 = vector.load %arg1[%c7, %c0_52, %c0_53] : memref<8x4x4xbf16, #tpu.memory_space<vmem>>, vector<1x4x4xbf16>
    %66 = vector.shape_cast %65 : vector<1x4x4xbf16> to vector<4x4xbf16>
    %cst_54 = arith.constant dense<0.000000e+00> : vector<4x8xf32>
    %67 = tpu.matmul %66, %0, %cst_54 {dimension_numbers = #tpu.dot_dimension_numbers<[1], [0], [0], [1], [0, 0, 1, 1], [], []>} : vector<4x4xbf16>, vector<4x8xbf16>, vector<4x8xf32> -> vector<4x8xf32>
    %68 = arith.truncf %67 : vector<4x8xf32> to vector<4x8xbf16>
    %cst_55 = arith.constant dense<0.000000e+00> : vector<8x8xf32>
    %69 = tpu.matmul %1, %68, %cst_55 {dimension_numbers = #tpu.dot_dimension_numbers<[1], [0], [0], [1], [0, 0, 1, 1], [], []>} : vector<8x4xbf16>, vector<4x8xbf16>, vector<8x8xf32> -> vector<8x8xf32>
    %70 = arith.truncf %69 : vector<8x8xf32> to vector<8x8xbf16>
    %c7_56 = arith.constant 7 : index
    %c0_57 = arith.constant 0 : index
    %c0_58 = arith.constant 0 : index
    %71 = vector.load %arg4[%c7_56, %c0_57, %c0_58] : memref<8x8x8xbf16, #tpu.memory_space<vmem>>, vector<1x8x8xbf16>
    %72 = vector.shape_cast %71 : vector<1x8x8xbf16> to vector<8x8xbf16>
    %73 = vector.shape_cast %70 : vector<8x8xbf16> to vector<1x8x8xbf16>
    tpu.vector_store %arg4[%c7_56, %c0_57, %c0_58], %73 {strides = array<i32>} : memref<8x8x8xbf16, #tpu.memory_space<vmem>>, vector<1x8x8xbf16>,
    return
  }
  func.func @transform_0(%arg0: i32) -> (i32, i32, i32) {
    %c0_i32 = arith.constant 0 : i32
    %c0_i32_0 = arith.constant 0 : i32
    %c0_i32_1 = arith.constant 0 : i32
    return %arg0, %c0_i32, %c0_i32_0 : i32, i32, i32
  }
  func.func @transform_1(%arg0: i32) -> (i32, i32) {
    %c0_i32 = arith.constant 0 : i32
    %c0_i32_0 = arith.constant 0 : i32
    %c0_i32_1 = arith.constant 0 : i32
    return %c0_i32, %c0_i32_0 : i32, i32
  }
  func.func @transform_2(%arg0: i32) -> (i32, i32) {
    %c0_i32 = arith.constant 0 : i32
    %c0_i32_0 = arith.constant 0 : i32
    %c0_i32_1 = arith.constant 0 : i32
    return %c0_i32, %c0_i32_0 : i32, i32
  }
  func.func @transform_3(%arg0: i32) -> (i32, i32, i32) {
    %c0_i32 = arith.constant 0 : i32
    %c0_i32_0 = arith.constant 0 : i32
    %c0_i32_1 = arith.constant 0 : i32
    return %arg0, %c0_i32, %c0_i32_0 : i32, i32, i32
  }
}

module attributes {stable_mosaic.version = 11 : i64} {
  func.func @_dec_cls_kernel(%arg0: i32, %arg1: memref<144x128xbf16, #tpu.memory_space<vmem>>, %arg2: memref<72x128xbf16, #tpu.memory_space<vmem>>, %arg3: memref<16x144xbf16, #tpu.memory_space<vmem>>, %arg4: memref<16x72xbf16, #tpu.memory_space<vmem>>, %arg5: memref<16x1xf32, #tpu.memory_space<vmem>>, %arg6: memref<3x16xbf16, #tpu.memory_space<vmem>>, %arg7: memref<3x1xf32, #tpu.memory_space<vmem>>, %arg8: memref<3x128xbf16, #tpu.memory_space<vmem>>) attributes {dimension_semantics = [#tpu.dimension_semantics<parallel>], iteration_bounds = array<i64: 1>, scalar_prefetch = 0 : i64, scratch_operands = 0 : i64, tpu.core_type = #tpu.core_type<tc>, window_params = [{transform_indices = @transform_0, window_bounds = array<i64: 144, 128>}, {transform_indices = @transform_1, window_bounds = array<i64: 72, 128>}, {pipeline_mode = #tpu.pipeline_mode<synchronous>, transform_indices = @transform_2, window_bounds = array<i64: 16, 144>}, {pipeline_mode = #tpu.pipeline_mode<synchronous>, transform_indices = @transform_3, window_bounds = array<i64: 16, 72>}, {pipeline_mode = #tpu.pipeline_mode<synchronous>, transform_indices = @transform_4, window_bounds = array<i64: 16, 1>}, {pipeline_mode = #tpu.pipeline_mode<synchronous>, transform_indices = @transform_5, window_bounds = array<i64: 3, 16>}, {pipeline_mode = #tpu.pipeline_mode<synchronous>, transform_indices = @transform_6, window_bounds = array<i64: 3, 1>}, {transform_indices = @transform_7, window_bounds = array<i64: 3, 128>}]} {
    %c0 = arith.constant 0 : index
    %c0_0 = arith.constant 0 : index
    %0 = vector.load %arg3[%c0, %c0_0] : memref<16x144xbf16, #tpu.memory_space<vmem>>, vector<16x144xbf16>
    %c0_1 = arith.constant 0 : index
    %c0_2 = arith.constant 0 : index
    %1 = vector.load %arg1[%c0_1, %c0_2] : memref<144x128xbf16, #tpu.memory_space<vmem>>, vector<144x128xbf16>
    %cst = arith.constant dense<0.000000e+00> : vector<16x128xf32>
    %2 = tpu.matmul %0, %1, %cst {dimension_numbers = #tpu.dot_dimension_numbers<[1], [0], [0], [1], [0, 0, 1, 1], [], []>} : vector<16x144xbf16>, vector<144x128xbf16>, vector<16x128xf32> -> vector<16x128xf32>
    %c0_3 = arith.constant 0 : index
    %c0_4 = arith.constant 0 : index
    %3 = vector.load %arg4[%c0_3, %c0_4] : memref<16x72xbf16, #tpu.memory_space<vmem>>, vector<16x72xbf16>
    %c0_5 = arith.constant 0 : index
    %c0_6 = arith.constant 0 : index
    %4 = vector.load %arg2[%c0_5, %c0_6] : memref<72x128xbf16, #tpu.memory_space<vmem>>, vector<72x128xbf16>
    %cst_7 = arith.constant dense<0.000000e+00> : vector<16x128xf32>
    %5 = tpu.matmul %3, %4, %cst_7 {dimension_numbers = #tpu.dot_dimension_numbers<[1], [0], [0], [1], [0, 0, 1, 1], [], []>} : vector<16x72xbf16>, vector<72x128xbf16>, vector<16x128xf32> -> vector<16x128xf32>
    %6 = arith.addf %2, %5 : vector<16x128xf32>
    %c0_8 = arith.constant 0 : index
    %c0_9 = arith.constant 0 : index
    %7 = vector.load %arg5[%c0_8, %c0_9] : memref<16x1xf32, #tpu.memory_space<vmem>>, vector<16x1xf32>
    %8 = vector.broadcast %7 : vector<16x1xf32> to vector<16x128xf32>
    %9 = arith.addf %6, %8 : vector<16x128xf32>
    %cst_10 = arith.constant 0.000000e+00 : f32
    %10 = vector.broadcast %cst_10 : f32 to vector<16x128xf32>
    %11 = arith.maximumf %9, %10 : vector<16x128xf32>
    %c0_11 = arith.constant 0 : index
    %c0_12 = arith.constant 0 : index
    %12 = vector.load %arg6[%c0_11, %c0_12] : memref<3x16xbf16, #tpu.memory_space<vmem>>, vector<3x16xbf16>
    %13 = arith.truncf %11 : vector<16x128xf32> to vector<16x128xbf16>
    %cst_13 = arith.constant dense<0.000000e+00> : vector<3x128xf32>
    %14 = tpu.matmul %12, %13, %cst_13 {dimension_numbers = #tpu.dot_dimension_numbers<[1], [0], [0], [1], [0, 0, 1, 1], [], []>} : vector<3x16xbf16>, vector<16x128xbf16>, vector<3x128xf32> -> vector<3x128xf32>
    %c0_14 = arith.constant 0 : index
    %c0_15 = arith.constant 0 : index
    %15 = vector.load %arg7[%c0_14, %c0_15] : memref<3x1xf32, #tpu.memory_space<vmem>>, vector<3x1xf32>
    %16 = vector.broadcast %15 : vector<3x1xf32> to vector<3x128xf32>
    %17 = arith.addf %14, %16 : vector<3x128xf32>
    %18 = arith.truncf %17 : vector<3x128xf32> to vector<3x128xbf16>
    %c0_16 = arith.constant 0 : index
    %c0_17 = arith.constant 0 : index
    %19 = vector.load %arg8[%c0_16, %c0_17] : memref<3x128xbf16, #tpu.memory_space<vmem>>, vector<3x128xbf16>
    tpu.vector_store %arg8[%c0_16, %c0_17], %18 {strides = array<i32>} : memref<3x128xbf16, #tpu.memory_space<vmem>>, vector<3x128xbf16>,
    return
  }
  func.func @transform_0(%arg0: i32) -> (i32, i32) {
    %c0_i32 = arith.constant 0 : i32
    %c0_i32_0 = arith.constant 0 : i32
    return %c0_i32, %arg0 : i32, i32
  }
  func.func @transform_1(%arg0: i32) -> (i32, i32) {
    %c0_i32 = arith.constant 0 : i32
    %c0_i32_0 = arith.constant 0 : i32
    return %c0_i32, %arg0 : i32, i32
  }
  func.func @transform_2(%arg0: i32) -> (i32, i32) {
    %c0_i32 = arith.constant 0 : i32
    %c0_i32_0 = arith.constant 0 : i32
    %c0_i32_1 = arith.constant 0 : i32
    return %c0_i32, %c0_i32_0 : i32, i32
  }
  func.func @transform_3(%arg0: i32) -> (i32, i32) {
    %c0_i32 = arith.constant 0 : i32
    %c0_i32_0 = arith.constant 0 : i32
    %c0_i32_1 = arith.constant 0 : i32
    return %c0_i32, %c0_i32_0 : i32, i32
  }
  func.func @transform_4(%arg0: i32) -> (i32, i32) {
    %c0_i32 = arith.constant 0 : i32
    %c0_i32_0 = arith.constant 0 : i32
    %c0_i32_1 = arith.constant 0 : i32
    return %c0_i32, %c0_i32_0 : i32, i32
  }
  func.func @transform_5(%arg0: i32) -> (i32, i32) {
    %c0_i32 = arith.constant 0 : i32
    %c0_i32_0 = arith.constant 0 : i32
    %c0_i32_1 = arith.constant 0 : i32
    return %c0_i32, %c0_i32_0 : i32, i32
  }
  func.func @transform_6(%arg0: i32) -> (i32, i32) {
    %c0_i32 = arith.constant 0 : i32
    %c0_i32_0 = arith.constant 0 : i32
    %c0_i32_1 = arith.constant 0 : i32
    return %c0_i32, %c0_i32_0 : i32, i32
  }
  func.func @transform_7(%arg0: i32) -> (i32, i32) {
    %c0_i32 = arith.constant 0 : i32
    %c0_i32_0 = arith.constant 0 : i32
    return %c0_i32, %arg0 : i32, i32
  }
}

module attributes {stable_mosaic.version = 11 : i64} {
  func.func @_resize_kernel(%arg0: i32, %arg1: memref<3x8x8xbf16, #tpu.memory_space<vmem>>, %arg2: memref<8x16xbf16, #tpu.memory_space<vmem>>, %arg3: memref<16x8xbf16, #tpu.memory_space<vmem>>, %arg4: memref<3x16x16xf32, #tpu.memory_space<vmem>>) attributes {dimension_semantics = [#tpu.dimension_semantics<parallel>], iteration_bounds = array<i64: 2>, scalar_prefetch = 0 : i64, scratch_operands = 0 : i64, tpu.core_type = #tpu.core_type<tc>, window_params = [{transform_indices = @transform_0, window_bounds = array<i64: 3, 8, 8>}, {pipeline_mode = #tpu.pipeline_mode<synchronous>, transform_indices = @transform_1, window_bounds = array<i64: 8, 16>}, {pipeline_mode = #tpu.pipeline_mode<synchronous>, transform_indices = @transform_2, window_bounds = array<i64: 16, 8>}, {transform_indices = @transform_3, window_bounds = array<i64: 3, 16, 16>}]} {
    %c0 = arith.constant 0 : index
    %c0_0 = arith.constant 0 : index
    %0 = vector.load %arg2[%c0, %c0_0] : memref<8x16xbf16, #tpu.memory_space<vmem>>, vector<8x16xbf16>
    %c0_1 = arith.constant 0 : index
    %c0_2 = arith.constant 0 : index
    %1 = vector.load %arg3[%c0_1, %c0_2] : memref<16x8xbf16, #tpu.memory_space<vmem>>, vector<16x8xbf16>
    %c0_3 = arith.constant 0 : index
    %c0_4 = arith.constant 0 : index
    %c0_5 = arith.constant 0 : index
    %2 = vector.load %arg1[%c0_3, %c0_4, %c0_5] : memref<3x8x8xbf16, #tpu.memory_space<vmem>>, vector<1x8x8xbf16>
    %3 = vector.shape_cast %2 : vector<1x8x8xbf16> to vector<8x8xbf16>
    %cst = arith.constant dense<0.000000e+00> : vector<8x16xf32>
    %4 = tpu.matmul %3, %0, %cst {dimension_numbers = #tpu.dot_dimension_numbers<[1], [0], [0], [1], [0, 0, 1, 1], [], []>} : vector<8x8xbf16>, vector<8x16xbf16>, vector<8x16xf32> -> vector<8x16xf32>
    %5 = arith.truncf %4 : vector<8x16xf32> to vector<8x16xbf16>
    %cst_6 = arith.constant dense<0.000000e+00> : vector<16x16xf32>
    %6 = tpu.matmul %1, %5, %cst_6 {dimension_numbers = #tpu.dot_dimension_numbers<[1], [0], [0], [1], [0, 0, 1, 1], [], []>} : vector<16x8xbf16>, vector<8x16xbf16>, vector<16x16xf32> -> vector<16x16xf32>
    %c0_7 = arith.constant 0 : index
    %c0_8 = arith.constant 0 : index
    %c0_9 = arith.constant 0 : index
    %7 = vector.load %arg4[%c0_7, %c0_8, %c0_9] : memref<3x16x16xf32, #tpu.memory_space<vmem>>, vector<1x16x16xf32>
    %8 = vector.shape_cast %7 : vector<1x16x16xf32> to vector<16x16xf32>
    %9 = vector.shape_cast %6 : vector<16x16xf32> to vector<1x16x16xf32>
    tpu.vector_store %arg4[%c0_7, %c0_8, %c0_9], %9 {strides = array<i32>} : memref<3x16x16xf32, #tpu.memory_space<vmem>>, vector<1x16x16xf32>,
    %c1 = arith.constant 1 : index
    %c0_10 = arith.constant 0 : index
    %c0_11 = arith.constant 0 : index
    %10 = vector.load %arg1[%c1, %c0_10, %c0_11] : memref<3x8x8xbf16, #tpu.memory_space<vmem>>, vector<1x8x8xbf16>
    %11 = vector.shape_cast %10 : vector<1x8x8xbf16> to vector<8x8xbf16>
    %cst_12 = arith.constant dense<0.000000e+00> : vector<8x16xf32>
    %12 = tpu.matmul %11, %0, %cst_12 {dimension_numbers = #tpu.dot_dimension_numbers<[1], [0], [0], [1], [0, 0, 1, 1], [], []>} : vector<8x8xbf16>, vector<8x16xbf16>, vector<8x16xf32> -> vector<8x16xf32>
    %13 = arith.truncf %12 : vector<8x16xf32> to vector<8x16xbf16>
    %cst_13 = arith.constant dense<0.000000e+00> : vector<16x16xf32>
    %14 = tpu.matmul %1, %13, %cst_13 {dimension_numbers = #tpu.dot_dimension_numbers<[1], [0], [0], [1], [0, 0, 1, 1], [], []>} : vector<16x8xbf16>, vector<8x16xbf16>, vector<16x16xf32> -> vector<16x16xf32>
    %c1_14 = arith.constant 1 : index
    %c0_15 = arith.constant 0 : index
    %c0_16 = arith.constant 0 : index
    %15 = vector.load %arg4[%c1_14, %c0_15, %c0_16] : memref<3x16x16xf32, #tpu.memory_space<vmem>>, vector<1x16x16xf32>
    %16 = vector.shape_cast %15 : vector<1x16x16xf32> to vector<16x16xf32>
    %17 = vector.shape_cast %14 : vector<16x16xf32> to vector<1x16x16xf32>
    tpu.vector_store %arg4[%c1_14, %c0_15, %c0_16], %17 {strides = array<i32>} : memref<3x16x16xf32, #tpu.memory_space<vmem>>, vector<1x16x16xf32>,
    %c2 = arith.constant 2 : index
    %c0_17 = arith.constant 0 : index
    %c0_18 = arith.constant 0 : index
    %18 = vector.load %arg1[%c2, %c0_17, %c0_18] : memref<3x8x8xbf16, #tpu.memory_space<vmem>>, vector<1x8x8xbf16>
    %19 = vector.shape_cast %18 : vector<1x8x8xbf16> to vector<8x8xbf16>
    %cst_19 = arith.constant dense<0.000000e+00> : vector<8x16xf32>
    %20 = tpu.matmul %19, %0, %cst_19 {dimension_numbers = #tpu.dot_dimension_numbers<[1], [0], [0], [1], [0, 0, 1, 1], [], []>} : vector<8x8xbf16>, vector<8x16xbf16>, vector<8x16xf32> -> vector<8x16xf32>
    %21 = arith.truncf %20 : vector<8x16xf32> to vector<8x16xbf16>
    %cst_20 = arith.constant dense<0.000000e+00> : vector<16x16xf32>
    %22 = tpu.matmul %1, %21, %cst_20 {dimension_numbers = #tpu.dot_dimension_numbers<[1], [0], [0], [1], [0, 0, 1, 1], [], []>} : vector<16x8xbf16>, vector<8x16xbf16>, vector<16x16xf32> -> vector<16x16xf32>
    %c2_21 = arith.constant 2 : index
    %c0_22 = arith.constant 0 : index
    %c0_23 = arith.constant 0 : index
    %23 = vector.load %arg4[%c2_21, %c0_22, %c0_23] : memref<3x16x16xf32, #tpu.memory_space<vmem>>, vector<1x16x16xf32>
    %24 = vector.shape_cast %23 : vector<1x16x16xf32> to vector<16x16xf32>
    %25 = vector.shape_cast %22 : vector<16x16xf32> to vector<1x16x16xf32>
    tpu.vector_store %arg4[%c2_21, %c0_22, %c0_23], %25 {strides = array<i32>} : memref<3x16x16xf32, #tpu.memory_space<vmem>>, vector<1x16x16xf32>,
    return
  }
  func.func @transform_0(%arg0: i32) -> (i32, i32, i32) {
    %c0_i32 = arith.constant 0 : i32
    %c0_i32_0 = arith.constant 0 : i32
    %c0_i32_1 = arith.constant 0 : i32
    return %arg0, %c0_i32, %c0_i32_0 : i32, i32, i32
  }
  func.func @transform_1(%arg0: i32) -> (i32, i32) {
    %c0_i32 = arith.constant 0 : i32
    %c0_i32_0 = arith.constant 0 : i32
    %c0_i32_1 = arith.constant 0 : i32
    return %c0_i32, %c0_i32_0 : i32, i32
  }
  func.func @transform_2(%arg0: i32) -> (i32, i32) {
    %c0_i32 = arith.constant 0 : i32
    %c0_i32_0 = arith.constant 0 : i32
    %c0_i32_1 = arith.constant 0 : i32
    return %c0_i32, %c0_i32_0 : i32, i32
  }
  func.func @transform_3(%arg0: i32) -> (i32, i32, i32) {
    %c0_i32 = arith.constant 0 : i32
    %c0_i32_0 = arith.constant 0 : i32
    %c0_i32_1 = arith.constant 0 : i32
    return %arg0, %c0_i32, %c0_i32_0 : i32, i32, i32
  }
}

</mosaic_0001>

<llo_original>
// kernel: model_debug_forward.5
$region0: #{model_debug_forward.5}
  #allocation0 [shape = 'u32[]', space=smem, size = 0x4, offset = 0x4, fixed_abs, tag = 'smem constant byte address 0x4 - core index']
  #allocation1 [shape = 'u32[144,128]{1,0:T(1,128)}', space=vmem, size = 0x12000, scoped, tag = 'internal scratch']
  %s0 = inlined_call_operand.vmem [shape: bf16[36,128], index: 0, kind: input, shape index: {}]
  %s1 = inlined_call_operand.vmem [shape: bf16[8,36], index: 1, kind: input, shape index: {}]
  %s2 = inlined_call_operand.vmem [shape: f32[8,1], index: 2, kind: input, shape index: {}]
  %s3 = inlined_call_operand.vmem [shape: bf16[8,128], index: 3, kind: output, shape index: {}]
  %s4 = sld [smem:[#allocation0]]
  $region22: #{model_debug_forward.5} parent=0
    _
  %s6 = ssub.s32 1, %s4
  %s7 = scalar_select 0, %s6, %s4
  // Predicated region
  $region2: #{model_debug_forward.5} parent=0 // pred_check
    _
  $region3: #{model_debug_forward.5} parent=0 // pred_check_branch
    %9 = sbr.rel (0) target = $region5
  $region4: #{model_debug_forward.5} parent=0 // pred_region
    _
  $region5: #{model_debug_forward.5} parent=0 // pred_fallthru
    _
  // Predicated region
  $region6: #{model_debug_forward.5} parent=0 // pred_check
    _
  $region7: #{model_debug_forward.5} parent=0 // pred_check_branch
    %11 = sbr.rel (0) target = $region9
  $region8: #{model_debug_forward.5} parent=0 // pred_region
    _
  $region9: #{model_debug_forward.5} parent=0 // pred_fallthru
    _
  // Predicated region
  $region10: #{model_debug_forward.5} parent=0 // pred_check
    _
  $region11: #{model_debug_forward.5} parent=0 // pred_check_branch
    %13 = sbr.rel (0) target = $region13
  $region12: #{model_debug_forward.5} parent=0 // pred_region
    _
  $region13: #{model_debug_forward.5} parent=0 // pred_fallthru
    _
  %v15 = vld [vmem:[%s1] sm:$0xf]
  %v16 = vld [vmem:[%s0] sm:$0xf]
  %v17 = vld [vmem:[%s0 + $0x4] sm:$0xf]
  %v18 = vld [vmem:[%s0 + $0x8] sm:$0xf]
  %v19 = vld [vmem:[%s0 + $0xc] sm:$0xf]
  %v20 = vld [vmem:[%s0 + $0x10] sm:$0x3]
  %v21 = vld [vmem:[%s2] sm:$0xff]
  %23 = vset.pattern.permute.xlu0 0
  %24 = vperm.xlu0 %23, %v21
  %v25 = vpop.permute.xlu0 %24
  %v32 = vunpack.c.l.b16 %v16
  %v33 = vunpack.c.l.b16 %v17
  %v34 = vunpack.c.l.b16 %v18
  %v35 = vunpack.c.l.b16 %v19
  %v36 = vunpack.c.l.b16 %v20
  %v37 = vpack.c.b16 %v33, %v32
  %v38 = vpack.c.b16 %v35, %v34
  %v39 = vpack.c.b16 %v36, %v36
  %vm42 = vcmask 293888
  %v44 = vsel %vm42, %v15, 0
  %vm46 = vcmask 1041408
  %v48 = vsel %vm46, %v39, 0
  %50 = vmatprep.subr.bf16.mxu0 0
  %51 = vmatpush1.bf16.msra.mxu0 0
  %52 = vmatprep.subr.bf16.mxu0 0
  %53 = vmatpush1.bf16.msra.mxu0 0
  %54 = vmatprep.subr.bf16.mxu0 0
  %55 = vmatpush1.bf16.msra.mxu0 0
  %56 = vmatprep.subr.bf16.mxu0 0
  %57 = vmatpush1.bf16.msra.mxu0 0
  %58 = vmatprep.subr.bf16.mxu0 0
  %59 = vmatpush1.bf16.msra.mxu0 0
  %60 = vmatprep.subr.bf16.mxu0 0
  %61 = vmatpush1.bf16.msra.mxu0 %v48
  %62 = vmatprep.subr.bf16.mxu0 0
  %63 = vmatpush1.bf16.msra.mxu0 %v38
  %64 = vmatprep.subr.bf16.mxu0 0
  %65 = vmatpush1.bf16.msra.mxu0 %v37
  %66 = vmatprep.subr.bf16.mxu0 0
  %67 = vmatpush2.bf16.msra.mxu0 0
  %68 = vmatprep.subr.bf16.mxu0 0
  %69 = vmatpush2.bf16.msra.mxu0 0
  %70 = vmatprep.subr.bf16.mxu0 0
  %71 = vmatpush2.bf16.msra.mxu0 0
  %72 = vmatprep.subr.bf16.mxu0 0
  %73 = vmatpush2.bf16.msra.mxu0 0
  %74 = vmatprep.subr.bf16.mxu0 0
  %75 = vmatpush2.bf16.msra.mxu0 0
  %76 = vmatprep.subr.bf16.mxu0 0
  %77 = vmatpush2.bf16.msra.mxu0 0
  %78 = vmatprep.subr.bf16.mxu0 0
  %79 = vmatpush2.bf16.msra.mxu0 0
  %80 = vmatprep.subr.bf16.mxu0 0
  %81 = vmatpush2.bf16.msra.mxu0 0
  %82 = vmatprep.mubr.bf16.mxu0 0
  %83 = vmatmul.mubr.bf16.gmra.mxu0 %v44
  %v84 = vpop.f32.mrf.mxu0
  %v85 = vadd.f32 %v25, %v84
  %v86 = vpop.f32.mrf.mxu0
  %v87 = vpop.f32.mrf.mxu0
  %v88 = vpop.f32.mrf.mxu0
  %89 = vdwg.mxu0
  %v90 = vmax.f32 %v85, 0.0
  %v91 = vpack.c.bf16 %v90, %v90
  %92 = vst [vmem:[%s3] sm:$0xf] %v91
  // Predicated region
  $region14: #{model_debug_forward.5} parent=0 // pred_check
    _
  $region15: #{model_debug_forward.5} parent=0 // pred_check_branch
    %94 = sbr.rel (0) target = $region17
  $region16: #{model_debug_forward.5} parent=0 // pred_region
    _
  $region17: #{model_debug_forward.5} parent=0 // pred_fallthru
    _
  // Predicated region
  $region18: #{model_debug_forward.5} parent=0 // pred_check
    _
  $region19: #{model_debug_forward.5} parent=0 // pred_check_branch
    %96 = sbr.rel (0) target = $region21
  $region20: #{model_debug_forward.5} parent=0 // pred_region
    _
  $region21: #{model_debug_forward.5} parent=0 // pred_fallthru
    _

// kernel: model_debug_forward.6
$region0: #{model_debug_forward.6}
  #allocation0 [shape = 'u32[]', space=smem, size = 0x4, offset = 0x4, fixed_abs, tag = 'smem constant byte address 0x4 - core index']
  #allocation1 [shape = 'u32[144,128]{1,0:T(1,128)}', space=vmem, size = 0x12000, scoped, tag = 'internal scratch']
  %s0 = inlined_call_operand.vmem [shape: bf16[72,128], index: 0, kind: input, shape index: {}]
  %s1 = inlined_call_operand.vmem [shape: bf16[16,72], index: 1, kind: input, shape index: {}]
  %s2 = inlined_call_operand.vmem [shape: f32[16,1], index: 2, kind: input, shape index: {}]
  %s3 = inlined_call_operand.vmem [shape: bf16[16,128], index: 3, kind: output, shape index: {}]
  %s4 = sld [smem:[#allocation0]]
  $region22: #{model_debug_forward.6} parent=0
    _
  %s6 = ssub.s32 1, %s4
  %s7 = scalar_select 0, %s6, %s4
  // Predicated region
  $region2: #{model_debug_forward.6} parent=0 // pred_check
    _
  $region3: #{model_debug_forward.6} parent=0 // pred_check_branch
    %9 = sbr.rel (0) target = $region5
  $region4: #{model_debug_forward.6} parent=0 // pred_region
    _
  $region5: #{model_debug_forward.6} parent=0 // pred_fallthru
    _
  // Predicated region
  $region6: #{model_debug_forward.6} parent=0 // pred_check
    _
  $region7: #{model_debug_forward.6} parent=0 // pred_check_branch
    %11 = sbr.rel (0) target = $region9
  $region8: #{model_debug_forward.6} parent=0 // pred_region
    _
  $region9: #{model_debug_forward.6} parent=0 // pred_fallthru
    _
  // Predicated region
  $region10: #{model_debug_forward.6} parent=0 // pred_check
    _
  $region11: #{model_debug_forward.6} parent=0 // pred_check_branch
    %13 = sbr.rel (0) target = $region13
  $region12: #{model_debug_forward.6} parent=0 // pred_region
    _
  $region13: #{model_debug_forward.6} parent=0 // pred_fallthru
    _
  %v15 = vld [vmem:[%s1] sm:$0xf]
  %v16 = vld [vmem:[%s1 + $0x4] sm:$0xf]
  %v17 = vld [vmem:[%s0] sm:$0xf]
  %v18 = vld [vmem:[%s0 + $0x4] sm:$0xf]
  %v19 = vld [vmem:[%s0 + $0x8] sm:$0xf]
  %v20 = vld [vmem:[%s0 + $0xc] sm:$0xf]
  %v21 = vld [vmem:[%s0 + $0x10] sm:$0xf]
  %v22 = vld [vmem:[%s0 + $0x14] sm:$0xf]
  %v23 = vld [vmem:[%s0 + $0x18] sm:$0xf]
  %v24 = vld [vmem:[%s0 + $0x1c] sm:$0xf]
  %v25 = vld [vmem:[%s0 + $0x20] sm:$0xf]
  %v26 = vld [vmem:[%s2] sm:$0xff]
  %v27 = vld [vmem:[%s2 + $0x8] sm:$0xff]
  %29 = vset.pattern.permute.xlu0 0
  %30 = vperm.xlu0 %29, %v26
  %v31 = vpop.permute.xlu0 %30
  %34 = vset.pattern.permute.xlu0 0
  %35 = vperm.xlu0 %34, %v27
  %v36 = vpop.permute.xlu0 %35
  %v40 = vunpack.c.l.b16 %v15
  %v41 = vunpack.c.l.b16 %v16
  %v42 = vpack.c.b16 %v41, %v40
  %v52 = vunpack.c.l.b16 %v17
  %v53 = vunpack.c.l.b16 %v18
  %v54 = vunpack.c.l.b16 %v19
  %v55 = vunpack.c.l.b16 %v20
  %v56 = vunpack.c.l.b16 %v21
  %v57 = vunpack.c.l.b16 %v22
  %v58 = vunpack.c.l.b16 %v23
  %v59 = vunpack.c.l.b16 %v24
  %v60 = vunpack.c.l.b16 %v25
  %v61 = vpack.c.b16 %v53, %v52
  %v62 = vpack.c.b16 %v55, %v54
  %v63 = vpack.c.b16 %v57, %v56
  %v64 = vpack.c.b16 %v59, %v58
  %v65 = vpack.c.b16 %v60, %v60
  %vm70 = vcmask 588800
  %v72 = vsel %vm70, %v42, 0
  %vm74 = vcmask 1043456
  %v76 = vsel %vm74, %v65, 0
  %78 = vmatprep.subr.bf16.mxu0 0
  %79 = vmatpush1.bf16.msra.mxu0 0
  %80 = vmatprep.subr.bf16.mxu0 0
  %81 = vmatpush1.bf16.msra.mxu0 0
  %82 = vmatprep.subr.bf16.mxu0 0
  %83 = vmatpush1.bf16.msra.mxu0 0
  %84 = vmatprep.subr.bf16.mxu0 0
  %85 = vmatpush1.bf16.msra.mxu0 %v76
  %86 = vmatprep.subr.bf16.mxu0 0
  %87 = vmatpush1.bf16.msra.mxu0 %v64
  %88 = vmatprep.subr.bf16.mxu0 0
  %89 = vmatpush1.bf16.msra.mxu0 %v63
  %90 = vmatprep.subr.bf16.mxu0 0
  %91 = vmatpush1.bf16.msra.mxu0 %v62
  %92 = vmatprep.subr.bf16.mxu0 0
  %93 = vmatpush1.bf16.msra.mxu0 %v61
  %94 = vmatprep.subr.bf16.mxu0 0
  %95 = vmatpush2.bf16.msra.mxu0 0
  %96 = vmatprep.subr.bf16.mxu0 0
  %97 = vmatpush2.bf16.msra.mxu0 0
  %98 = vmatprep.subr.bf16.mxu0 0
  %99 = vmatpush2.bf16.msra.mxu0 0
  %100 = vmatprep.subr.bf16.mxu0 0
  %101 = vmatpush2.bf16.msra.mxu0 0
  %102 = vmatprep.subr.bf16.mxu0 0
  %103 = vmatpush2.bf16.msra.mxu0 0
  %104 = vmatprep.subr.bf16.mxu0 0
  %105 = vmatpush2.bf16.msra.mxu0 0
  %106 = vmatprep.subr.bf16.mxu0 0
  %107 = vmatpush2.bf16.msra.mxu0 0
  %108 = vmatprep.subr.bf16.mxu0 0
  %109 = vmatpush2.bf16.msra.mxu0 0
  %110 = vmatprep.mubr.bf16.mxu0 0
  %111 = vmatmul.mubr.bf16.gmra.mxu0 %v72
  %v112 = vpop.f32.mrf.mxu0
  %v113 = vadd.f32 %v31, %v112
  %v114 = vpop.f32.mrf.mxu0
  %v115 = vpop.f32.mrf.mxu0
  %v116 = vadd.f32 %v36, %v115
  %v117 = vpop.f32.mrf.mxu0
  %118 = vdwg.mxu0
  %v119 = vmax.f32 %v113, 0.0
  %v120 = vmax.f32 %v116, 0.0
  %v121 = vpack.c.bf16 %v120, %v119
  %v123 = vunpack.c.l.b16 %v121
  %v124 = vunpack.c.h.b16 %v121
  %v125 = vpack.c.b16 %v123, %v123
  %v126 = vpack.c.b16 %v124, %v124
  %129 = vst [vmem:[%s3] sm:$0xf] %v125
  %130 = vst [vmem:[%s3 + $0x4] sm:$0xf] %v126
  // Predicated region
  $region14: #{model_debug_forward.6} parent=0 // pred_check
    _
  $region15: #{model_debug_forward.6} parent=0 // pred_check_branch
    %132 = sbr.rel (0) target = $region17
  $region16: #{model_debug_forward.6} parent=0 // pred_region
    _
  $region17: #{model_debug_forward.6} parent=0 // pred_fallthru
    _
  // Predicated region
  $region18: #{model_debug_forward.6} parent=0 // pred_check
    _
  $region19: #{model_debug_forward.6} parent=0 // pred_check_branch
    %134 = sbr.rel (0) target = $region21
  $region20: #{model_debug_forward.6} parent=0 // pred_region
    _
  $region21: #{model_debug_forward.6} parent=0 // pred_fallthru
    _

// kernel: model_debug_forward.7
$region0: #{model_debug_forward.7}
  #allocation0 [shape = 'u32[]', space=smem, size = 0x4, offset = 0x4, fixed_abs, tag = 'smem constant byte address 0x4 - core index']
  #allocation1 [shape = 'u32[144,128]{1,0:T(1,128)}', space=vmem, size = 0x12000, scoped, tag = 'internal scratch']
  %s0 = inlined_call_operand.vmem [shape: bf16[32,4,4], index: 0, kind: input, shape index: {}]
  %s1 = inlined_call_operand.vmem [shape: bf16[4,8], index: 1, kind: input, shape index: {}]
  %s2 = inlined_call_operand.vmem [shape: bf16[8,4], index: 2, kind: input, shape index: {}]
  %s3 = inlined_call_operand.vmem [shape: bf16[32,8,8], index: 3, kind: output, shape index: {}]
  %s4 = sld [smem:[#allocation0]]
  $region45: #{model_debug_forward.7} parent=0
    _
  %s6 = ssub.s32 1, %s4
  %s7 = scalar_select 0, %s6, %s4
  loop: start=0, step=1, limit=6
  $region2: #{model_debug_forward.7} parent=0 // loop_pre_header
    _
  $region3: #{model_debug_forward.7} parent=0 // loop_header
    %s9 = sphi 0, %s13
    %p10 = scmp.ge.s32.totalorder %s9, 6
    %s19 = sphi 0, %s21
    %s22 = sphi 0, %s19
    %s23 = sphi 0, %s22
    %s39 = sphi 0, %s23
    %s43 = sphi 0, %s43
    %s45 = sphi 0, %s43
    %s46 = sphi 0, %s45
    %s60 = sphi 0, %s46
    %s64 = sphi 0, %s64
    %s66 = sphi 0, %s64
    %s67 = sphi 0, %s66
    %s81 = sphi 0, %s67
    %s87 = sphi 0, %s89
    %s90 = sphi 0, %s87
    %s91 = sphi 0, %s90
    %s107 = sphi 0, %s91
  $region4: #{model_debug_forward.7} parent=0 // loop_header_branch
    %12 = sbr.rel (%p10) target = $region8
  $region5: #{model_debug_forward.7} parent=0 // loop_body
    %s14 = ssub.s32 %s9, 1
    %s15 = ssub.s32 %s9, 2
    %s16 = sadd.s32 %s9, 1
    %s17 = ssub.s32 %s9, %s16
    %p18 = scmp.eq.s32.totalorder %s17, 0
    %s20 = sadd.s32 %s19, 1
    %s21 = scalar_select %p18, %s19, %s20
    %p24 = pneg %p18
    %p25 = scmp.eq.s32.totalorder %s9, 3
    %p26 = por %p24, %p25
    %p27 = scmp.ne.s32.totalorder %s19, %s22
    %p28 = scmp.eq.s32.totalorder %s9, 0
    %p29 = por %p27, %p28
    %p30 = scmp.ne.s32.totalorder %s19, %s22
    %p31 = scmp.eq.s32.totalorder %s14, 3
    %p32 = por %p30, %p31
    %p33 = scmp.ne.s32.totalorder %s22, %s23
    %p34 = scmp.eq.s32.totalorder %s14, 0
    %p35 = por %p33, %p34
    %p36 = scmp.ne.s32.totalorder %s22, %s23
    %p37 = scmp.eq.s32.totalorder %s15, 3
    %p38 = por %p36, %p37
    %p40 = scmp.ne.s32.totalorder %s23, %s39
    %p41 = scmp.eq.s32.totalorder %s15, 0
    %p42 = por %p40, %p41
    %s44 = sadd.s32 %s43, 1
    %p47 = scmp.eq.s32.totalorder %s9, 3
    %p48 = scmp.ne.s32.totalorder %s43, %s45
    %p49 = scmp.eq.s32.totalorder %s9, 0
    %p50 = por %p48, %p49
    %p51 = scmp.ne.s32.totalorder %s43, %s45
    %p52 = scmp.eq.s32.totalorder %s14, 3
    %p53 = por %p51, %p52
    %p54 = scmp.ne.s32.totalorder %s45, %s46
    %p55 = scmp.eq.s32.totalorder %s14, 0
    %p56 = por %p54, %p55
    %p57 = scmp.ne.s32.totalorder %s45, %s46
    %p58 = scmp.eq.s32.totalorder %s15, 3
    %p59 = por %p57, %p58
    %p61 = scmp.ne.s32.totalorder %s46, %s60
    %p62 = scmp.eq.s32.totalorder %s15, 0
    %p63 = por %p61, %p62
    %s65 = sadd.s32 %s64, 1
    %p68 = scmp.eq.s32.totalorder %s9, 3
    %p69 = scmp.ne.s32.totalorder %s64, %s66
    %p70 = scmp.eq.s32.totalorder %s9, 0
    %p71 = por %p69, %p70
    %p72 = scmp.ne.s32.totalorder %s64, %s66
    %p73 = scmp.eq.s32.totalorder %s14, 3
    %p74 = por %p72, %p73
    %p75 = scmp.ne.s32.totalorder %s66, %s67
    %p76 = scmp.eq.s32.totalorder %s14, 0
    %p77 = por %p75, %p76
    %p78 = scmp.ne.s32.totalorder %s66, %s67
    %p79 = scmp.eq.s32.totalorder %s15, 3
    %p80 = por %p78, %p79
    %p82 = scmp.ne.s32.totalorder %s67, %s81
    %p83 = scmp.eq.s32.totalorder %s15, 0
    %p84 = por %p82, %p83
    %s85 = ssub.s32 %s9, %s16
    %p86 = scmp.eq.s32.totalorder %s85, 0
    %s88 = sadd.s32 %s87, 1
    %s89 = scalar_select %p86, %s87, %s88
    %p92 = pneg %p86
    %p93 = scmp.eq.s32.totalorder %s9, 3
    %p94 = por %p92, %p93
    %p95 = scmp.ne.s32.totalorder %s87, %s90
    %p96 = scmp.eq.s32.totalorder %s9, 0
    %p97 = por %p95, %p96
    %p98 = scmp.ne.s32.totalorder %s87, %s90
    %p99 = scmp.eq.s32.totalorder %s14, 3
    %p100 = por %p98, %p99
    %p101 = scmp.ne.s32.totalorder %s90, %s91
    %p102 = scmp.eq.s32.totalorder %s14, 0
    %p103 = por %p101, %p102
    %p104 = scmp.ne.s32.totalorder %s90, %s91
    %p105 = scmp.eq.s32.totalorder %s15, 3
    %p106 = por %p104, %p105
    %p108 = scmp.ne.s32.totalorder %s91, %s107
    %p109 = scmp.eq.s32.totalorder %s15, 0
    %p110 = por %p108, %p109
    %p111 = scmp.le.s32.totalorder 1, %s9
    %p112 = scmp.lt.s32.totalorder %s9, 5
    %p113 = pnand %p111, %p112
    %p114 = pneg %p113
    // Predicated region
    $region9: #{model_debug_forward.7} parent=5 // pred_check
      _
    $region10: #{model_debug_forward.7} parent=5 // pred_check_branch
      %116 = sbr.rel (%p113) target = $region12
    $region11: #{model_debug_forward.7} parent=5 // pred_region
      %s117 = ssub.s32 %s9, 1
      // Predicated region
      $region13: #{model_debug_forward.7} parent=11 // pred_check
        %p118 = pneg %p56
      $region14: #{model_debug_forward.7} parent=11 // pred_check_branch
        %120 = sbr.rel (%p118) target = $region16
      $region15: #{model_debug_forward.7} parent=11 // pred_region
        _
      $region16: #{model_debug_forward.7} parent=11 // pred_fallthru
        _
      // Predicated region
      $region17: #{model_debug_forward.7} parent=11 // pred_check
        %p121 = pneg %p77
      $region18: #{model_debug_forward.7} parent=11 // pred_check_branch
        %123 = sbr.rel (%p121) target = $region20
      $region19: #{model_debug_forward.7} parent=11 // pred_region
        _
      $region20: #{model_debug_forward.7} parent=11 // pred_fallthru
        _
    $region12: #{model_debug_forward.7} parent=5 // pred_fallthru
      _
    %p124 = scmp.lt.s32.totalorder %s9, 4
    // Predicated region
    $region21: #{model_debug_forward.7} parent=5 // pred_check
      %p125 = pneg %p124
    $region22: #{model_debug_forward.7} parent=5 // pred_check_branch
      %127 = sbr.rel (%p125) target = $region24
    $region23: #{model_debug_forward.7} parent=5 // pred_region
      // Predicated region
      $region25: #{model_debug_forward.7} parent=23 // pred_check
        %p128 = pneg %p29
      $region26: #{model_debug_forward.7} parent=23 // pred_check_branch
        %130 = sbr.rel (%p128) target = $region28
      $region27: #{model_debug_forward.7} parent=23 // pred_region
        %s131 = smul.u32 8, %s9
        %p132 = scmp.lt.s32.totalorder %s131, 31
        %s133 = scalar_select %p132, %s131, 31
        %s134 = smul.addr %s133, 2
        %s135 = scalar_lea.vmem %s0, %s134
        %s136 = smul.u32 8, %s9
      $region28: #{model_debug_forward.7} parent=23 // pred_fallthru
        _
    $region24: #{model_debug_forward.7} parent=5 // pred_fallthru
      _
    %p137 = scmp.le.s32.totalorder 1, %s9
    %p138 = scmp.lt.s32.totalorder %s9, 5
    %p139 = pnand %p137, %p138
    %p140 = pneg %p139
    // Predicated region
    $region29: #{model_debug_forward.7} parent=5 // pred_check
      _
    $region30: #{model_debug_forward.7} parent=5 // pred_check_branch
      %142 = sbr.rel (%p139) target = $region32
    $region31: #{model_debug_forward.7} parent=5 // pred_region
      %s143 = ssub.s32 %s9, 1
      %s144 = smul.u32 8, %s14
      %p145 = scmp.lt.s32.totalorder %s144, 31
      %s146 = scalar_select %p145, %s144, 31
      %s147 = smul.addr %s146, 2
      %s148 = scalar_lea.vmem %s0, %s147
      %p149 = pneg %p35
      %p150 = pneg %p32
      %p151 = pneg %p56
      %p152 = pneg %p53
      %p153 = pneg %p77
      %p154 = pneg %p74
      %p155 = pneg %p103
      %p156 = pneg %p100
      %s157 = smul.u32 8, %s14
      %p158 = scmp.lt.s32.totalorder %s157, 31
      %s159 = scalar_select %p158, %s157, 31
      %s160 = smul.addr %s159, 4
      %s161 = scalar_lea.vmem %s3, %s160
      %s162 = smul.u32 8, %s14
      %p163 = scmp.lt.s32.totalorder %s162, 31
      %s164 = scalar_select %p163, %s162, 31
      %s165 = smul.addr %s164, 2
      %s166 = scalar_lea.vmem %s0, %s165
      %s167 = smul.u32 8, %s14
      %s168 = smul.u32 8, %s14
      %p169 = scmp.lt.s32.totalorder %s168, 31
      %s170 = scalar_select %p169, %s168, 31
      %s171 = smul.addr %s170, 4
      %s172 = scalar_lea.vmem %s3, %s171
      %s173 = smul.u32 8, %s14
      %v175 = vld [vmem:[%s1] sm:$0x3]
      %v176 = vld [vmem:[%s2] sm:$0xf]
      %v177 = vld [vmem:[%s166] sm:$0x3]
      %vm178 = vcmask 31744
      %v180 = vsel %vm178, %v177, 0
      %vm182 = vcmask 1041408
      %v184 = vsel %vm182, %v175, 0
      %186 = vmatprep.subr.bf16.mxu0 0
      %187 = vmatpush1.bf16.msra.mxu0 0
      %188 = vmatprep.subr.bf16.mxu0 0
      %189 = vmatpush1.bf16.msra.mxu0 0
      %190 = vmatprep.subr.bf16.mxu0 0
      %191 = vmatpush1.bf16.msra.mxu0 0
      %192 = vmatprep.subr.bf16.mxu0 0
      %193 = vmatpush1.bf16.msra.mxu0 0
      %194 = vmatprep.subr.bf16.mxu0 0
      %195 = vmatpush1.bf16.msra.mxu0 0
      %196 = vmatprep.subr.bf16.mxu0 0
      %197 = vmatpush1.bf16.msra.mxu0 0
      %198 = vmatprep.subr.bf16.mxu0 0
      %199 = vmatpush1.bf16.msra.mxu0 0
      %200 = vmatprep.subr.bf16.mxu0 0
      %201 = vmatpush1.bf16.msra.mxu0 %v184
      %202 = vmatprep.subr.bf16.mxu0 0
      %203 = vmatpush2.bf16.msra.mxu0 0
      %204 = vmatprep.subr.bf16.mxu0 0
      %205 = vmatpush2.bf16.msra.mxu0 0
      %206 = vmatprep.subr.bf16.mxu0 0
      %207 = vmatpush2.bf16.msra.mxu0 0
      %208 = vmatprep.subr.bf16.mxu0 0
      %209 = vmatpush2.bf16.msra.mxu0 0
      %210 = vmatprep.subr.bf16.mxu0 0
      %211 = vmatpush2.bf16.msra.mxu0 0
      %212 = vmatprep.subr.bf16.mxu0 0
      %213 = vmatpush2.bf16.msra.mxu0 0
      %214 = vmatprep.subr.bf16.mxu0 0
      %215 = vmatpush2.bf16.msra.mxu0 0
      %216 = vmatprep.subr.bf16.mxu0 0
      %217 = vmatpush2.bf16.msra.mxu0 0
      %218 = vmatprep.mubr.bf16.mxu0 0
      %219 = vmatmul.mubr.bf16.gmra.mxu0 %v180
      %v220 = vpop.f32.mrf.mxu0
      %v221 = vadd.f32 0.0, %v220
      %v222 = vpop.f32.mrf.mxu0
      %v223 = vpop.f32.mrf.mxu0
      %v224 = vpop.f32.mrf.mxu0
      %225 = vdwg.mxu0
      %v226 = vpack.c.bf16 %v221, %v221
      %v228 = vsel %vm178, %v176, 0
      %v231 = vsel %vm182, %v226, 0
      %233 = vmatprep.subr.bf16.mxu0 0
      %234 = vmatpush1.bf16.msra.mxu0 0
      %235 = vmatprep.subr.bf16.mxu0 0
      %236 = vmatpush1.bf16.msra.mxu0 0
      %237 = vmatprep.subr.bf16.mxu0 0
      %238 = vmatpush1.bf16.msra.mxu0 0
      %239 = vmatprep.subr.bf16.mxu0 0
      %240 = vmatpush1.bf16.msra.mxu0 0
      %241 = vmatprep.subr.bf16.mxu0 0
      %242 = vmatpush1.bf16.msra.mxu0 0
      %243 = vmatprep.subr.bf16.mxu0 0
      %244 = vmatpush1.bf16.msra.mxu0 0
      %245 = vmatprep.subr.bf16.mxu0 0
      %246 = vmatpush1.bf16.msra.mxu0 0
      %247 = vmatprep.subr.bf16.mxu0 0
      %248 = vmatpush1.bf16.msra.mxu0 %v231
      %249 = vmatprep.subr.bf16.mxu0 0
      %250 = vmatpush2.bf16.msra.mxu0 0
      %251 = vmatprep.subr.bf16.mxu0 0
      %252 = vmatpush2.bf16.msra.mxu0 0
      %253 = vmatprep.subr.bf16.mxu0 0
      %254 = vmatpush2.bf16.msra.mxu0 0
      %255 = vmatprep.subr.bf16.mxu0 0
      %256 = vmatpush2.bf16.msra.mxu0 0
      %257 = vmatprep.subr.bf16.mxu0 0
      %258 = vmatpush2.bf16.msra.mxu0 0
      %259 = vmatprep.subr.bf16.mxu0 0
      %260 = vmatpush2.bf16.msra.mxu0 0
      %261 = vmatprep.subr.bf16.mxu0 0
      %262 = vmatpush2.bf16.msra.mxu0 0
      %263 = vmatprep.subr.bf16.mxu0 0
      %264 = vmatpush2.bf16.msra.mxu0 0
      %265 = vmatprep.mubr.bf16.mxu0 0
      %266 = vmatmul.mubr.bf16.gmra.mxu0 %v228
      %v267 = vpop.f32.mrf.mxu0
      %v268 = vadd.f32 0.0, %v267
      %v269 = vpop.f32.mrf.mxu0
      %v270 = vpop.f32.mrf.mxu0
      %v271 = vpop.f32.mrf.mxu0
      %272 = vdwg.mxu0
      %v273 = vpack.c.bf16 %v268, %v268
      %vm274 = vcmask 60416
      %275 = vst.msk [vmem:[%s172] sm:$0xf] %vm274, %v273
      %s276 = scalar_lea.vmem %s166, 2
      %v277 = vld [vmem:[%s276] sm:$0x3]
      %v279 = vsel %vm178, %v277, 0
      %281 = vmatprep.subr.bf16.mxu0 0
      %282 = vmatpush1.bf16.msra.mxu0 0
      %283 = vmatprep.subr.bf16.mxu0 0
      %284 = vmatpush1.bf16.msra.mxu0 0
      %285 = vmatprep.subr.bf16.mxu0 0
      %286 = vmatpush1.bf16.msra.mxu0 0
      %287 = vmatprep.subr.bf16.mxu0 0
      %288 = vmatpush1.bf16.msra.mxu0 0
      %289 = vmatprep.subr.bf16.mxu0 0
      %290 = vmatpush1.bf16.msra.mxu0 0
      %291 = vmatprep.subr.bf16.mxu0 0
      %292 = vmatpush1.bf16.msra.mxu0 0
      %293 = vmatprep.subr.bf16.mxu0 0
      %294 = vmatpush1.bf16.msra.mxu0 0
      %295 = vmatprep.subr.bf16.mxu0 0
      %296 = vmatpush1.bf16.msra.mxu0 %v184
      %297 = vmatprep.subr.bf16.mxu0 0
      %298 = vmatpush2.bf16.msra.mxu0 0
      %299 = vmatprep.subr.bf16.mxu0 0
      %300 = vmatpush2.bf16.msra.mxu0 0
      %301 = vmatprep.subr.bf16.mxu0 0
      %302 = vmatpush2.bf16.msra.mxu0 0
      %303 = vmatprep.subr.bf16.mxu0 0
      %304 = vmatpush2.bf16.msra.mxu0 0
      %305 = vmatprep.subr.bf16.mxu0 0
      %306 = vmatpush2.bf16.msra.mxu0 0
      %307 = vmatprep.subr.bf16.mxu0 0
      %308 = vmatpush2.bf16.msra.mxu0 0
      %309 = vmatprep.subr.bf16.mxu0 0
      %310 = vmatpush2.bf16.msra.mxu0 0
      %311 = vmatprep.subr.bf16.mxu0 0
      %312 = vmatpush2.bf16.msra.mxu0 0
      %313 = vmatprep.mubr.bf16.mxu0 0
      %314 = vmatmul.mubr.bf16.gmra.mxu0 %v279
      %v315 = vpop.f32.mrf.mxu0
      %v316 = vadd.f32 0.0, %v315
      %v317 = vpop.f32.mrf.mxu0
      %v318 = vpop.f32.mrf.mxu0
      %v319 = vpop.f32.mrf.mxu0
      %320 = vdwg.mxu0
      %v321 = vpack.c.bf16 %v316, %v316
      %v323 = vsel %vm182, %v321, 0
      %325 = vmatprep.subr.bf16.mxu0 0
      %326 = vmatpush1.bf16.msra.mxu0 0
      %327 = vmatprep.subr.bf16.mxu0 0
      %328 = vmatpush1.bf16.msra.mxu0 0
      %329 = vmatprep.subr.bf16.mxu0 0
      %330 = vmatpush1.bf16.msra.mxu0 0
      %331 = vmatprep.subr.bf16.mxu0 0
      %332 = vmatpush1.bf16.msra.mxu0 0
      %333 = vmatprep.subr.bf16.mxu0 0
      %334 = vmatpush1.bf16.msra.mxu0 0
      %335 = vmatprep.subr.bf16.mxu0 0
      %336 = vmatpush1.bf16.msra.mxu0 0
      %337 = vmatprep.subr.bf16.mxu0 0
      %338 = vmatpush1.bf16.msra.mxu0 0
      %339 = vmatprep.subr.bf16.mxu0 0
      %340 = vmatpush1.bf16.msra.mxu0 %v323
      %341 = vmatprep.subr.bf16.mxu0 0
      %342 = vmatpush2.bf16.msra.mxu0 0
      %343 = vmatprep.subr.bf16.mxu0 0
      %344 = vmatpush2.bf16.msra.mxu0 0
      %345 = vmatprep.subr.bf16.mxu0 0
      %346 = vmatpush2.bf16.msra.mxu0 0
      %347 = vmatprep.subr.bf16.mxu0 0
      %348 = vmatpush2.bf16.msra.mxu0 0
      %349 = vmatprep.subr.bf16.mxu0 0
      %350 = vmatpush2.bf16.msra.mxu0 0
      %351 = vmatprep.subr.bf16.mxu0 0
      %352 = vmatpush2.bf16.msra.mxu0 0
      %353 = vmatprep.subr.bf16.mxu0 0
      %354 = vmatpush2.bf16.msra.mxu0 0
      %355 = vmatprep.subr.bf16.mxu0 0
      %356 = vmatpush2.bf16.msra.mxu0 0
      %357 = vmatprep.mubr.bf16.mxu0 0
      %358 = vmatmul.mubr.bf16.gmra.mxu0 %v228
      %v359 = vpop.f32.mrf.mxu0
      %v360 = vadd.f32 0.0, %v359
      %v361 = vpop.f32.mrf.mxu0
      %v362 = vpop.f32.mrf.mxu0
      %v363 = vpop.f32.mrf.mxu0
      %364 = vdwg.mxu0
      %v365 = vpack.c.bf16 %v360, %v360
      %s366 = scalar_lea.vmem %s172, 4
      %367 = vst.msk [vmem:[%s366] sm:$0xf] %vm274, %v365
      %s368 = scalar_lea.vmem %s166, 4
      %v369 = vld [vmem:[%s368] sm:$0x3]
      %v371 = vsel %vm178, %v369, 0
      %373 = vmatprep.subr.bf16.mxu0 0
      %374 = vmatpush1.bf16.msra.mxu0 0
      %375 = vmatprep.subr.bf16.mxu0 0
      %376 = vmatpush1.bf16.msra.mxu0 0
      %377 = vmatprep.subr.bf16.mxu0 0
      %378 = vmatpush1.bf16.msra.mxu0 0
      %379 = vmatprep.subr.bf16.mxu0 0
      %380 = vmatpush1.bf16.msra.mxu0 0
      %381 = vmatprep.subr.bf16.mxu0 0
      %382 = vmatpush1.bf16.msra.mxu0 0
      %383 = vmatprep.subr.bf16.mxu0 0
      %384 = vmatpush1.bf16.msra.mxu0 0
      %385 = vmatprep.subr.bf16.mxu0 0
      %386 = vmatpush1.bf16.msra.mxu0 0
      %387 = vmatprep.subr.bf16.mxu0 0
      %388 = vmatpush1.bf16.msra.mxu0 %v184
      %389 = vmatprep.subr.bf16.mxu0 0
      %390 = vmatpush2.bf16.msra.mxu0 0
      %391 = vmatprep.subr.bf16.mxu0 0
      %392 = vmatpush2.bf16.msra.mxu0 0
      %393 = vmatprep.subr.bf16.mxu0 0
      %394 = vmatpush2.bf16.msra.mxu0 0
      %395 = vmatprep.subr.bf16.mxu0 0
      %396 = vmatpush2.bf16.msra.mxu0 0
      %397 = vmatprep.subr.bf16.mxu0 0
      %398 = vmatpush2.bf16.msra.mxu0 0
      %399 = vmatprep.subr.bf16.mxu0 0
      %400 = vmatpush2.bf16.msra.mxu0 0
      %401 = vmatprep.subr.bf16.mxu0 0
      %402 = vmatpush2.bf16.msra.mxu0 0
      %403 = vmatprep.subr.bf16.mxu0 0
      %404 = vmatpush2.bf16.msra.mxu0 0
      %405 = vmatprep.mubr.bf16.mxu0 0
      %406 = vmatmul.mubr.bf16.gmra.mxu0 %v371
      %v407 = vpop.f32.mrf.mxu0
      %v408 = vadd.f32 0.0, %v407
      %v409 = vpop.f32.mrf.mxu0
      %v410 = vpop.f32.mrf.mxu0
      %v411 = vpop.f32.mrf.mxu0
      %412 = vdwg.mxu0
      %v413 = vpack.c.bf16 %v408, %v408
      %v415 = vsel %vm182, %v413, 0
      %417 = vmatprep.subr.bf16.mxu0 0
      %418 = vmatpush1.bf16.msra.mxu0 0
      %419 = vmatprep.subr.bf16.mxu0 0
      %420 = vmatpush1.bf16.msra.mxu0 0
      %421 = vmatprep.subr.bf16.mxu0 0
      %422 = vmatpush1.bf16.msra.mxu0 0
      %423 = vmatprep.subr.bf16.mxu0 0
      %424 = vmatpush1.bf16.msra.mxu0 0
      %425 = vmatprep.subr.bf16.mxu0 0
      %426 = vmatpush1.bf16.msra.mxu0 0
      %427 = vmatprep.subr.bf16.mxu0 0
      %428 = vmatpush1.bf16.msra.mxu0 0
      %429 = vmatprep.subr.bf16.mxu0 0
      %430 = vmatpush1.bf16.msra.mxu0 0
      %431 = vmatprep.subr.bf16.mxu0 0
      %432 = vmatpush1.bf16.msra.mxu0 %v415
      %433 = vmatprep.subr.bf16.mxu0 0
      %434 = vmatpush2.bf16.msra.mxu0 0
      %435 = vmatprep.subr.bf16.mxu0 0
      %436 = vmatpush2.bf16.msra.mxu0 0
      %437 = vmatprep.subr.bf16.mxu0 0
      %438 = vmatpush2.bf16.msra.mxu0 0
      %439 = vmatprep.subr.bf16.mxu0 0
      %440 = vmatpush2.bf16.msra.mxu0 0
      %441 = vmatprep.subr.bf16.mxu0 0
      %442 = vmatpush2.bf16.msra.mxu0 0
      %443 = vmatprep.subr.bf16.mxu0 0
      %444 = vmatpush2.bf16.msra.mxu0 0
      %445 = vmatprep.subr.bf16.mxu0 0
      %446 = vmatpush2.bf16.msra.mxu0 0
      %447 = vmatprep.subr.bf16.mxu0 0
      %448 = vmatpush2.bf16.msra.mxu0 0
      %449 = vmatprep.mubr.bf16.mxu0 0
      %450 = vmatmul.mubr.bf16.gmra.mxu0 %v228
      %v451 = vpop.f32.mrf.mxu0
      %v452 = vadd.f32 0.0, %v451
      %v453 = vpop.f32.mrf.mxu0
      %v454 = vpop.f32.mrf.mxu0
      %v455 = vpop.f32.mrf.mxu0
      %456 = vdwg.mxu0
      %v457 = vpack.c.bf16 %v452, %v452
      %s458 = scalar_lea.vmem %s172, 8
      %459 = vst.msk [vmem:[%s458] sm:$0xf] %vm274, %v457
      %s460 = scalar_lea.vmem %s166, 6
      %v461 = vld [vmem:[%s460] sm:$0x3]
      %v463 = vsel %vm178, %v461, 0
      %465 = vmatprep.subr.bf16.mxu0 0
      %466 = vmatpush1.bf16.msra.mxu0 0
      %467 = vmatprep.subr.bf16.mxu0 0
      %468 = vmatpush1.bf16.msra.mxu0 0
      %469 = vmatprep.subr.bf16.mxu0 0
      %470 = vmatpush1.bf16.msra.mxu0 0
      %471 = vmatprep.subr.bf16.mxu0 0
      %472 = vmatpush1.bf16.msra.mxu0 0
      %473 = vmatprep.subr.bf16.mxu0 0
      %474 = vmatpush1.bf16.msra.mxu0 0
      %475 = vmatprep.subr.bf16.mxu0 0
      %476 = vmatpush1.bf16.msra.mxu0 0
      %477 = vmatprep.subr.bf16.mxu0 0
      %478 = vmatpush1.bf16.msra.mxu0 0
      %479 = vmatprep.subr.bf16.mxu0 0
      %480 = vmatpush1.bf16.msra.mxu0 %v184
      %481 = vmatprep.subr.bf16.mxu0 0
      %482 = vmatpush2.bf16.msra.mxu0 0
      %483 = vmatprep.subr.bf16.mxu0 0
      %484 = vmatpush2.bf16.msra.mxu0 0
      %485 = vmatprep.subr.bf16.mxu0 0
      %486 = vmatpush2.bf16.msra.mxu0 0
      %487 = vmatprep.subr.bf16.mxu0 0
      %488 = vmatpush2.bf16.msra.mxu0 0
      %489 = vmatprep.subr.bf16.mxu0 0
      %490 = vmatpush2.bf16.msra.mxu0 0
      %491 = vmatprep.subr.bf16.mxu0 0
      %492 = vmatpush2.bf16.msra.mxu0 0
      %493 = vmatprep.subr.bf16.mxu0 0
      %494 = vmatpush2.bf16.msra.mxu0 0
      %495 = vmatprep.subr.bf16.mxu0 0
      %496 = vmatpush2.bf16.msra.mxu0 0
      %497 = vmatprep.mubr.bf16.mxu0 0
      %498 = vmatmul.mubr.bf16.gmra.mxu0 %v463
      %v499 = vpop.f32.mrf.mxu0
      %v500 = vadd.f32 0.0, %v499
      %v501 = vpop.f32.mrf.mxu0
      %v502 = vpop.f32.mrf.mxu0
      %v503 = vpop.f32.mrf.mxu0
      %504 = vdwg.mxu0
      %v505 = vpack.c.bf16 %v500, %v500
      %v507 = vsel %vm182, %v505, 0
      %509 = vmatprep.subr.bf16.mxu0 0
      %510 = vmatpush1.bf16.msra.mxu0 0
      %511 = vmatprep.subr.bf16.mxu0 0
      %512 = vmatpush1.bf16.msra.mxu0 0
      %513 = vmatprep.subr.bf16.mxu0 0
      %514 = vmatpush1.bf16.msra.mxu0 0
      %515 = vmatprep.subr.bf16.mxu0 0
      %516 = vmatpush1.bf16.msra.mxu0 0
      %517 = vmatprep.subr.bf16.mxu0 0
      %518 = vmatpush1.bf16.msra.mxu0 0
      %519 = vmatprep.subr.bf16.mxu0 0
      %520 = vmatpush1.bf16.msra.mxu0 0
      %521 = vmatprep.subr.bf16.mxu0 0
      %522 = vmatpush1.bf16.msra.mxu0 0
      %523 = vmatprep.subr.bf16.mxu0 0
      %524 = vmatpush1.bf16.msra.mxu0 %v507
      %525 = vmatprep.subr.bf16.mxu0 0
      %526 = vmatpush2.bf16.msra.mxu0 0
      %527 = vmatprep.subr.bf16.mxu0 0
      %528 = vmatpush2.bf16.msra.mxu0 0
      %529 = vmatprep.subr.bf16.mxu0 0
      %530 = vmatpush2.bf16.msra.mxu0 0
      %531 = vmatprep.subr.bf16.mxu0 0
      %532 = vmatpush2.bf16.msra.mxu0 0
      %533 = vmatprep.subr.bf16.mxu0 0
      %534 = vmatpush2.bf16.msra.mxu0 0
      %535 = vmatprep.subr.bf16.mxu0 0
      %536 = vmatpush2.bf16.msra.mxu0 0
      %537 = vmatprep.subr.bf16.mxu0 0
      %538 = vmatpush2.bf16.msra.mxu0 0
      %539 = vmatprep.subr.bf16.mxu0 0
      %540 = vmatpush2.bf16.msra.mxu0 0
      %541 = vmatprep.mubr.bf16.mxu0 0
      %542 = vmatmul.mubr.bf16.gmra.mxu0 %v228
      %v543 = vpop.f32.mrf.mxu0
      %v544 = vadd.f32 0.0, %v543
      %v545 = vpop.f32.mrf.mxu0
      %v546 = vpop.f32.mrf.mxu0
      %v547 = vpop.f32.mrf.mxu0
      %548 = vdwg.mxu0
      %v549 = vpack.c.bf16 %v544, %v544
      %s550 = scalar_lea.vmem %s172, 12
      %551 = vst.msk [vmem:[%s550] sm:$0xf] %vm274, %v549
      %s552 = scalar_lea.vmem %s166, 8
      %v553 = vld [vmem:[%s552] sm:$0x3]
      %v555 = vsel %vm178, %v553, 0
      %557 = vmatprep.subr.bf16.mxu0 0
      %558 = vmatpush1.bf16.msra.mxu0 0
      %559 = vmatprep.subr.bf16.mxu0 0
      %560 = vmatpush1.bf16.msra.mxu0 0
      %561 = vmatprep.subr.bf16.mxu0 0
      %562 = vmatpush1.bf16.msra.mxu0 0
      %563 = vmatprep.subr.bf16.mxu0 0
      %564 = vmatpush1.bf16.msra.mxu0 0
      %565 = vmatprep.subr.bf16.mxu0 0
      %566 = vmatpush1.bf16.msra.mxu0 0
      %567 = vmatprep.subr.bf16.mxu0 0
      %568 = vmatpush1.bf16.msra.mxu0 0
      %569 = vmatprep.subr.bf16.mxu0 0
      %570 = vmatpush1.bf16.msra.mxu0 0
      %571 = vmatprep.subr.bf16.mxu0 0
      %572 = vmatpush1.bf16.msra.mxu0 %v184
      %573 = vmatprep.subr.bf16.mxu0 0
      %574 = vmatpush2.bf16.msra.mxu0 0
      %575 = vmatprep.subr.bf16.mxu0 0
      %576 = vmatpush2.bf16.msra.mxu0 0
      %577 = vmatprep.subr.bf16.mxu0 0
      %578 = vmatpush2.bf16.msra.mxu0 0
      %579 = vmatprep.subr.bf16.mxu0 0
      %580 = vmatpush2.bf16.msra.mxu0 0
      %581 = vmatprep.subr.bf16.mxu0 0
      %582 = vmatpush2.bf16.msra.mxu0 0
      %583 = vmatprep.subr.bf16.mxu0 0
      %584 = vmatpush2.bf16.msra.mxu0 0
      %585 = vmatprep.subr.bf16.mxu0 0
      %586 = vmatpush2.bf16.msra.mxu0 0
      %587 = vmatprep.subr.bf16.mxu0 0
      %588 = vmatpush2.bf16.msra.mxu0 0
      %589 = vmatprep.mubr.bf16.mxu0 0
      %590 = vmatmul.mubr.bf16.gmra.mxu0 %v555
      %v591 = vpop.f32.mrf.mxu0
      %v592 = vadd.f32 0.0, %v591
      %v593 = vpop.f32.mrf.mxu0
      %v594 = vpop.f32.mrf.mxu0
      %v595 = vpop.f32.mrf.mxu0
      %596 = vdwg.mxu0
      %v597 = vpack.c.bf16 %v592, %v592
      %v599 = vsel %vm182, %v597, 0
      %601 = vmatprep.subr.bf16.mxu0 0
      %602 = vmatpush1.bf16.msra.mxu0 0
      %603 = vmatprep.subr.bf16.mxu0 0
      %604 = vmatpush1.bf16.msra.mxu0 0
      %605 = vmatprep.subr.bf16.mxu0 0
      %606 = vmatpush1.bf16.msra.mxu0 0
      %607 = vmatprep.subr.bf16.mxu0 0
      %608 = vmatpush1.bf16.msra.mxu0 0
      %609 = vmatprep.subr.bf16.mxu0 0
      %610 = vmatpush1.bf16.msra.mxu0 0
      %611 = vmatprep.subr.bf16.mxu0 0
      %612 = vmatpush1.bf16.msra.mxu0 0
      %613 = vmatprep.subr.bf16.mxu0 0
      %614 = vmatpush1.bf16.msra.mxu0 0
      %615 = vmatprep.subr.bf16.mxu0 0
      %616 = vmatpush1.bf16.msra.mxu0 %v599
      %617 = vmatprep.subr.bf16.mxu0 0
      %618 = vmatpush2.bf16.msra.mxu0 0
      %619 = vmatprep.subr.bf16.mxu0 0
      %620 = vmatpush2.bf16.msra.mxu0 0
      %621 = vmatprep.subr.bf16.mxu0 0
      %622 = vmatpush2.bf16.msra.mxu0 0
      %623 = vmatprep.subr.bf16.mxu0 0
      %624 = vmatpush2.bf16.msra.mxu0 0
      %625 = vmatprep.subr.bf16.mxu0 0
      %626 = vmatpush2.bf16.msra.mxu0 0
      %627 = vmatprep.subr.bf16.mxu0 0
      %628 = vmatpush2.bf16.msra.mxu0 0
      %629 = vmatprep.subr.bf16.mxu0 0
      %630 = vmatpush2.bf16.msra.mxu0 0
      %631 = vmatprep.subr.bf16.mxu0 0
      %632 = vmatpush2.bf16.msra.mxu0 0
      %633 = vmatprep.mubr.bf16.mxu0 0
      %634 = vmatmul.mubr.bf16.gmra.mxu0 %v228
      %v635 = vpop.f32.mrf.mxu0
      %v636 = vadd.f32 0.0, %v635
      %v637 = vpop.f32.mrf.mxu0
      %v638 = vpop.f32.mrf.mxu0
      %v639 = vpop.f32.mrf.mxu0
      %640 = vdwg.mxu0
      %v641 = vpack.c.bf16 %v636, %v636
      %s642 = scalar_lea.vmem %s172, 16
      %643 = vst.msk [vmem:[%s642] sm:$0xf] %vm274, %v641
      %s644 = scalar_lea.vmem %s166, 10
      %v645 = vld [vmem:[%s644] sm:$0x3]
      %v647 = vsel %vm178, %v645, 0
      %649 = vmatprep.subr.bf16.mxu0 0
      %650 = vmatpush1.bf16.msra.mxu0 0
      %651 = vmatprep.subr.bf16.mxu0 0
      %652 = vmatpush1.bf16.msra.mxu0 0
      %653 = vmatprep.subr.bf16.mxu0 0
      %654 = vmatpush1.bf16.msra.mxu0 0
      %655 = vmatprep.subr.bf16.mxu0 0
      %656 = vmatpush1.bf16.msra.mxu0 0
      %657 = vmatprep.subr.bf16.mxu0 0
      %658 = vmatpush1.bf16.msra.mxu0 0
      %659 = vmatprep.subr.bf16.mxu0 0
      %660 = vmatpush1.bf16.msra.mxu0 0
      %661 = vmatprep.subr.bf16.mxu0 0
      %662 = vmatpush1.bf16.msra.mxu0 0
      %663 = vmatprep.subr.bf16.mxu0 0
      %664 = vmatpush1.bf16.msra.mxu0 %v184
      %665 = vmatprep.subr.bf16.mxu0 0
      %666 = vmatpush2.bf16.msra.mxu0 0
      %667 = vmatprep.subr.bf16.mxu0 0
      %668 = vmatpush2.bf16.msra.mxu0 0
      %669 = vmatprep.subr.bf16.mxu0 0
      %670 = vmatpush2.bf16.msra.mxu0 0
      %671 = vmatprep.subr.bf16.mxu0 0
      %672 = vmatpush2.bf16.msra.mxu0 0
      %673 = vmatprep.subr.bf16.mxu0 0
      %674 = vmatpush2.bf16.msra.mxu0 0
      %675 = vmatprep.subr.bf16.mxu0 0
      %676 = vmatpush2.bf16.msra.mxu0 0
      %677 = vmatprep.subr.bf16.mxu0 0
      %678 = vmatpush2.bf16.msra.mxu0 0
      %679 = vmatprep.subr.bf16.mxu0 0
      %680 = vmatpush2.bf16.msra.mxu0 0
      %681 = vmatprep.mubr.bf16.mxu0 0
      %682 = vmatmul.mubr.bf16.gmra.mxu0 %v647
      %v683 = vpop.f32.mrf.mxu0
      %v684 = vadd.f32 0.0, %v683
      %v685 = vpop.f32.mrf.mxu0
      %v686 = vpop.f32.mrf.mxu0
      %v687 = vpop.f32.mrf.mxu0
      %688 = vdwg.mxu0
      %v689 = vpack.c.bf16 %v684, %v684
      %v691 = vsel %vm182, %v689, 0
      %693 = vmatprep.subr.bf16.mxu0 0
      %694 = vmatpush1.bf16.msra.mxu0 0
      %695 = vmatprep.subr.bf16.mxu0 0
      %696 = vmatpush1.bf16.msra.mxu0 0
      %697 = vmatprep.subr.bf16.mxu0 0
      %698 = vmatpush1.bf16.msra.mxu0 0
      %699 = vmatprep.subr.bf16.mxu0 0
      %700 = vmatpush1.bf16.msra.mxu0 0
      %701 = vmatprep.subr.bf16.mxu0 0
      %702 = vmatpush1.bf16.msra.mxu0 0
      %703 = vmatprep.subr.bf16.mxu0 0
      %704 = vmatpush1.bf16.msra.mxu0 0
      %705 = vmatprep.subr.bf16.mxu0 0
      %706 = vmatpush1.bf16.msra.mxu0 0
      %707 = vmatprep.subr.bf16.mxu0 0
      %708 = vmatpush1.bf16.msra.mxu0 %v691
      %709 = vmatprep.subr.bf16.mxu0 0
      %710 = vmatpush2.bf16.msra.mxu0 0
      %711 = vmatprep.subr.bf16.mxu0 0
      %712 = vmatpush2.bf16.msra.mxu0 0
      %713 = vmatprep.subr.bf16.mxu0 0
      %714 = vmatpush2.bf16.msra.mxu0 0
      %715 = vmatprep.subr.bf16.mxu0 0
      %716 = vmatpush2.bf16.msra.mxu0 0
      %717 = vmatprep.subr.bf16.mxu0 0
      %718 = vmatpush2.bf16.msra.mxu0 0
      %719 = vmatprep.subr.bf16.mxu0 0
      %720 = vmatpush2.bf16.msra.mxu0 0
      %721 = vmatprep.subr.bf16.mxu0 0
      %722 = vmatpush2.bf16.msra.mxu0 0
      %723 = vmatprep.subr.bf16.mxu0 0
      %724 = vmatpush2.bf16.msra.mxu0 0
      %725 = vmatprep.mubr.bf16.mxu0 0
      %726 = vmatmul.mubr.bf16.gmra.mxu0 %v228
      %v727 = vpop.f32.mrf.mxu0
      %v728 = vadd.f32 0.0, %v727
      %v729 = vpop.f32.mrf.mxu0
      %v730 = vpop.f32.mrf.mxu0
      %v731 = vpop.f32.mrf.mxu0
      %732 = vdwg.mxu0
      %v733 = vpack.c.bf16 %v728, %v728
      %s734 = scalar_lea.vmem %s172, 20
      %735 = vst.msk [vmem:[%s734] sm:$0xf] %vm274, %v733
      %s736 = scalar_lea.vmem %s166, 12
      %v737 = vld [vmem:[%s736] sm:$0x3]
      %v739 = vsel %vm178, %v737, 0
      %741 = vmatprep.subr.bf16.mxu0 0
      %742 = vmatpush1.bf16.msra.mxu0 0
      %743 = vmatprep.subr.bf16.mxu0 0
      %744 = vmatpush1.bf16.msra.mxu0 0
      %745 = vmatprep.subr.bf16.mxu0 0
      %746 = vmatpush1.bf16.msra.mxu0 0
      %747 = vmatprep.subr.bf16.mxu0 0
      %748 = vmatpush1.bf16.msra.mxu0 0
      %749 = vmatprep.subr.bf16.mxu0 0
      %750 = vmatpush1.bf16.msra.mxu0 0
      %751 = vmatprep.subr.bf16.mxu0 0
      %752 = vmatpush1.bf16.msra.mxu0 0
      %753 = vmatprep.subr.bf16.mxu0 0
      %754 = vmatpush1.bf16.msra.mxu0 0
      %755 = vmatprep.subr.bf16.mxu0 0
      %756 = vmatpush1.bf16.msra.mxu0 %v184
      %757 = vmatprep.subr.bf16.mxu0 0
      %758 = vmatpush2.bf16.msra.mxu0 0
      %759 = vmatprep.subr.bf16.mxu0 0
      %760 = vmatpush2.bf16.msra.mxu0 0
      %761 = vmatprep.subr.bf16.mxu0 0
      %762 = vmatpush2.bf16.msra.mxu0 0
      %763 = vmatprep.subr.bf16.mxu0 0
      %764 = vmatpush2.bf16.msra.mxu0 0
      %765 = vmatprep.subr.bf16.mxu0 0
      %766 = vmatpush2.bf16.msra.mxu0 0
      %767 = vmatprep.subr.bf16.mxu0 0
      %768 = vmatpush2.bf16.msra.mxu0 0
      %769 = vmatprep.subr.bf16.mxu0 0
      %770 = vmatpush2.bf16.msra.mxu0 0
      %771 = vmatprep.subr.bf16.mxu0 0
      %772 = vmatpush2.bf16.msra.mxu0 0
      %773 = vmatprep.mubr.bf16.mxu0 0
      %774 = vmatmul.mubr.bf16.gmra.mxu0 %v739
      %v775 = vpop.f32.mrf.mxu0
      %v776 = vadd.f32 0.0, %v775
      %v777 = vpop.f32.mrf.mxu0
      %v778 = vpop.f32.mrf.mxu0
      %v779 = vpop.f32.mrf.mxu0
      %780 = vdwg.mxu0
      %v781 = vpack.c.bf16 %v776, %v776
      %v783 = vsel %vm182, %v781, 0
      %785 = vmatprep.subr.bf16.mxu0 0
      %786 = vmatpush1.bf16.msra.mxu0 0
      %787 = vmatprep.subr.bf16.mxu0 0
      %788 = vmatpush1.bf16.msra.mxu0 0
      %789 = vmatprep.subr.bf16.mxu0 0
      %790 = vmatpush1.bf16.msra.mxu0 0
      %791 = vmatprep.subr.bf16.mxu0 0
      %792 = vmatpush1.bf16.msra.mxu0 0
      %793 = vmatprep.subr.bf16.mxu0 0
      %794 = vmatpush1.bf16.msra.mxu0 0
      %795 = vmatprep.subr.bf16.mxu0 0
      %796 = vmatpush1.bf16.msra.mxu0 0
      %797 = vmatprep.subr.bf16.mxu0 0
      %798 = vmatpush1.bf16.msra.mxu0 0
      %799 = vmatprep.subr.bf16.mxu0 0
      %800 = vmatpush1.bf16.msra.mxu0 %v783
      %801 = vmatprep.subr.bf16.mxu0 0
      %802 = vmatpush2.bf16.msra.mxu0 0
      %803 = vmatprep.subr.bf16.mxu0 0
      %804 = vmatpush2.bf16.msra.mxu0 0
      %805 = vmatprep.subr.bf16.mxu0 0
      %806 = vmatpush2.bf16.msra.mxu0 0
      %807 = vmatprep.subr.bf16.mxu0 0
      %808 = vmatpush2.bf16.msra.mxu0 0
      %809 = vmatprep.subr.bf16.mxu0 0
      %810 = vmatpush2.bf16.msra.mxu0 0
      %811 = vmatprep.subr.bf16.mxu0 0
      %812 = vmatpush2.bf16.msra.mxu0 0
      %813 = vmatprep.subr.bf16.mxu0 0
      %814 = vmatpush2.bf16.msra.mxu0 0
      %815 = vmatprep.subr.bf16.mxu0 0
      %816 = vmatpush2.bf16.msra.mxu0 0
      %817 = vmatprep.mubr.bf16.mxu0 0
      %818 = vmatmul.mubr.bf16.gmra.mxu0 %v228
      %v819 = vpop.f32.mrf.mxu0
      %v820 = vadd.f32 0.0, %v819
      %v821 = vpop.f32.mrf.mxu0
      %v822 = vpop.f32.mrf.mxu0
      %v823 = vpop.f32.mrf.mxu0
      %824 = vdwg.mxu0
      %v825 = vpack.c.bf16 %v820, %v820
      %s826 = scalar_lea.vmem %s172, 24
      %827 = vst.msk [vmem:[%s826] sm:$0xf] %vm274, %v825
      %s828 = scalar_lea.vmem %s166, 14
      %v829 = vld [vmem:[%s828] sm:$0x3]
      %v831 = vsel %vm178, %v829, 0
      %833 = vmatprep.subr.bf16.mxu0 0
      %834 = vmatpush1.bf16.msra.mxu0 0
      %835 = vmatprep.subr.bf16.mxu0 0
      %836 = vmatpush1.bf16.msra.mxu0 0
      %837 = vmatprep.subr.bf16.mxu0 0
      %838 = vmatpush1.bf16.msra.mxu0 0
      %839 = vmatprep.subr.bf16.mxu0 0
      %840 = vmatpush1.bf16.msra.mxu0 0
      %841 = vmatprep.subr.bf16.mxu0 0
      %842 = vmatpush1.bf16.msra.mxu0 0
      %843 = vmatprep.subr.bf16.mxu0 0
      %844 = vmatpush1.bf16.msra.mxu0 0
      %845 = vmatprep.subr.bf16.mxu0 0
      %846 = vmatpush1.bf16.msra.mxu0 0
      %847 = vmatprep.subr.bf16.mxu0 0
      %848 = vmatpush1.bf16.msra.mxu0 %v184
      %849 = vmatprep.subr.bf16.mxu0 0
      %850 = vmatpush2.bf16.msra.mxu0 0
      %851 = vmatprep.subr.bf16.mxu0 0
      %852 = vmatpush2.bf16.msra.mxu0 0
      %853 = vmatprep.subr.bf16.mxu0 0
      %854 = vmatpush2.bf16.msra.mxu0 0
      %855 = vmatprep.subr.bf16.mxu0 0
      %856 = vmatpush2.bf16.msra.mxu0 0
      %857 = vmatprep.subr.bf16.mxu0 0
      %858 = vmatpush2.bf16.msra.mxu0 0
      %859 = vmatprep.subr.bf16.mxu0 0
      %860 = vmatpush2.bf16.msra.mxu0 0
      %861 = vmatprep.subr.bf16.mxu0 0
      %862 = vmatpush2.bf16.msra.mxu0 0
      %863 = vmatprep.subr.bf16.mxu0 0
      %864 = vmatpush2.bf16.msra.mxu0 0
      %865 = vmatprep.mubr.bf16.mxu0 0
      %866 = vmatmul.mubr.bf16.gmra.mxu0 %v831
      %v867 = vpop.f32.mrf.mxu0
      %v868 = vadd.f32 0.0, %v867
      %v869 = vpop.f32.mrf.mxu0
      %v870 = vpop.f32.mrf.mxu0
      %v871 = vpop.f32.mrf.mxu0
      %872 = vdwg.mxu0
      %v873 = vpack.c.bf16 %v868, %v868
      %v875 = vsel %vm182, %v873, 0
      %877 = vmatprep.subr.bf16.mxu0 0
      %878 = vmatpush1.bf16.msra.mxu0 0
      %879 = vmatprep.subr.bf16.mxu0 0
      %880 = vmatpush1.bf16.msra.mxu0 0
      %881 = vmatprep.subr.bf16.mxu0 0
      %882 = vmatpush1.bf16.msra.mxu0 0
      %883 = vmatprep.subr.bf16.mxu0 0
      %884 = vmatpush1.bf16.msra.mxu0 0
      %885 = vmatprep.subr.bf16.mxu0 0
      %886 = vmatpush1.bf16.msra.mxu0 0
      %887 = vmatprep.subr.bf16.mxu0 0
      %888 = vmatpush1.bf16.msra.mxu0 0
      %889 = vmatprep.subr.bf16.mxu0 0
      %890 = vmatpush1.bf16.msra.mxu0 0
      %891 = vmatprep.subr.bf16.mxu0 0
      %892 = vmatpush1.bf16.msra.mxu0 %v875
      %893 = vmatprep.subr.bf16.mxu0 0
      %894 = vmatpush2.bf16.msra.mxu0 0
      %895 = vmatprep.subr.bf16.mxu0 0
      %896 = vmatpush2.bf16.msra.mxu0 0
      %897 = vmatprep.subr.bf16.mxu0 0
      %898 = vmatpush2.bf16.msra.mxu0 0
      %899 = vmatprep.subr.bf16.mxu0 0
      %900 = vmatpush2.bf16.msra.mxu0 0
      %901 = vmatprep.subr.bf16.mxu0 0
      %902 = vmatpush2.bf16.msra.mxu0 0
      %903 = vmatprep.subr.bf16.mxu0 0
      %904 = vmatpush2.bf16.msra.mxu0 0
      %905 = vmatprep.subr.bf16.mxu0 0
      %906 = vmatpush2.bf16.msra.mxu0 0
      %907 = vmatprep.subr.bf16.mxu0 0
      %908 = vmatpush2.bf16.msra.mxu0 0
      %909 = vmatprep.mubr.bf16.mxu0 0
      %910 = vmatmul.mubr.bf16.gmra.mxu0 %v228
      %v911 = vpop.f32.mrf.mxu0
      %v912 = vadd.f32 0.0, %v911
      %v913 = vpop.f32.mrf.mxu0
      %v914 = vpop.f32.mrf.mxu0
      %v915 = vpop.f32.mrf.mxu0
      %916 = vdwg.mxu0
      %v917 = vpack.c.bf16 %v912, %v912
      %s918 = scalar_lea.vmem %s172, 28
      %919 = vst.msk [vmem:[%s918] sm:$0xf] %vm274, %v917
      %s920 = smul.u32 8, %s14
      %p921 = scmp.lt.s32.totalorder %s920, 31
      %s922 = scalar_select %p921, %s920, 31
      %s923 = smul.addr %s922, 4
      %s924 = scalar_lea.vmem %s3, %s923
      // Predicated region
      $region33: #{model_debug_forward.7} parent=31 // pred_check
        %p925 = pneg %p100
      $region34: #{model_debug_forward.7} parent=31 // pred_check_branch
        %927 = sbr.rel (%p925) target = $region36
      $region35: #{model_debug_forward.7} parent=31 // pred_region
        %s928 = smul.u32 8, %s14
      $region36: #{model_debug_forward.7} parent=31 // pred_fallthru
        _
    $region32: #{model_debug_forward.7} parent=5 // pred_fallthru
      _
    %p929 = scmp.le.s32.totalorder 2, %s9
    // Predicated region
    $region37: #{model_debug_forward.7} parent=5 // pred_check
      %p930 = pneg %p929
    $region38: #{model_debug_forward.7} parent=5 // pred_check_branch
      %932 = sbr.rel (%p930) target = $region40
    $region39: #{model_debug_forward.7} parent=5 // pred_region
      %s933 = ssub.s32 %s9, 2
      // Predicated region
      $region41: #{model_debug_forward.7} parent=39 // pred_check
        %p934 = pneg %p106
      $region42: #{model_debug_forward.7} parent=39 // pred_check_branch
        %936 = sbr.rel (%p934) target = $region44
      $region43: #{model_debug_forward.7} parent=39 // pred_region
        %s937 = smul.u32 8, %s15
        %p938 = scmp.lt.s32.totalorder %s937, 31
        %s939 = scalar_select %p938, %s937, 31
        %s940 = smul.addr %s939, 4
        %s941 = scalar_lea.vmem %s3, %s940
      $region44: #{model_debug_forward.7} parent=39 // pred_fallthru
        _
    $region40: #{model_debug_forward.7} parent=5 // pred_fallthru
      _
  $region6: #{model_debug_forward.7} parent=0 // loop_footer
    %s13 = sadd.s32 1, %s9
  $region7: #{model_debug_forward.7} parent=0 // loop_footer_branch
    %8 = sbr.rel target = $region3
  $region8: #{model_debug_forward.7} parent=0 // loop_exit
    _

// kernel: model_debug_forward.8
$region0: #{model_debug_forward.8}
  #allocation0 [shape = 'u32[]', space=smem, size = 0x4, offset = 0x4, fixed_abs, tag = 'smem constant byte address 0x4 - core index']
  #allocation1 [shape = 'u32[144,128]{1,0:T(1,128)}', space=vmem, size = 0x12000, scoped, tag = 'internal scratch']
  %s0 = inlined_call_operand.vmem [shape: bf16[144,128], index: 0, kind: input, shape index: {}]
  %s1 = inlined_call_operand.vmem [shape: bf16[72,128], index: 1, kind: input, shape index: {}]
  %s2 = inlined_call_operand.vmem [shape: bf16[16,144], index: 2, kind: input, shape index: {}]
  %s3 = inlined_call_operand.vmem [shape: bf16[16,72], index: 3, kind: input, shape index: {}]
  %s4 = inlined_call_operand.vmem [shape: f32[16,1], index: 4, kind: input, shape index: {}]
  %s5 = inlined_call_operand.vmem [shape: bf16[3,16], index: 5, kind: input, shape index: {}]
  %s6 = inlined_call_operand.vmem [shape: f32[3,1], index: 6, kind: input, shape index: {}]
  %s7 = inlined_call_operand.vmem [shape: bf16[3,128], index: 7, kind: output, shape index: {}]
  %s8 = sld [smem:[#allocation0]]
  $region38: #{model_debug_forward.8} parent=0
    _
  %s10 = ssub.s32 1, %s8
  %s11 = scalar_select 0, %s10, %s8
  // Predicated region
  $region2: #{model_debug_forward.8} parent=0 // pred_check
    _
  $region3: #{model_debug_forward.8} parent=0 // pred_check_branch
    %13 = sbr.rel (0) target = $region5
  $region4: #{model_debug_forward.8} parent=0 // pred_region
    _
  $region5: #{model_debug_forward.8} parent=0 // pred_fallthru
    _
  // Predicated region
  $region6: #{model_debug_forward.8} parent=0 // pred_check
    _
  $region7: #{model_debug_forward.8} parent=0 // pred_check_branch
    %15 = sbr.rel (0) target = $region9
  $region8: #{model_debug_forward.8} parent=0 // pred_region
    _
  $region9: #{model_debug_forward.8} parent=0 // pred_fallthru
    _
  // Predicated region
  $region10: #{model_debug_forward.8} parent=0 // pred_check
    _
  $region11: #{model_debug_forward.8} parent=0 // pred_check_branch
    %17 = sbr.rel (0) target = $region13
  $region12: #{model_debug_forward.8} parent=0 // pred_region
    _
  $region13: #{model_debug_forward.8} parent=0 // pred_fallthru
    _
  // Predicated region
  $region14: #{model_debug_forward.8} parent=0 // pred_check
    _
  $region15: #{model_debug_forward.8} parent=0 // pred_check_branch
    %19 = sbr.rel (0) target = $region17
  $region16: #{model_debug_forward.8} parent=0 // pred_region
    _
  $region17: #{model_debug_forward.8} parent=0 // pred_fallthru
    _
  // Predicated region
  $region18: #{model_debug_forward.8} parent=0 // pred_check
    _
  $region19: #{model_debug_forward.8} parent=0 // pred_check_branch
    %21 = sbr.rel (0) target = $region21
  $region20: #{model_debug_forward.8} parent=0 // pred_region
    _
  $region21: #{model_debug_forward.8} parent=0 // pred_fallthru
    _
  // Predicated region
  $region22: #{model_debug_forward.8} parent=0 // pred_check
    _
  $region23: #{model_debug_forward.8} parent=0 // pred_check_branch
    %23 = sbr.rel (0) target = $region25
  $region24: #{model_debug_forward.8} parent=0 // pred_region
    _
  $region25: #{model_debug_forward.8} parent=0 // pred_fallthru
    _
  // Predicated region
  $region26: #{model_debug_forward.8} parent=0 // pred_check
    _
  $region27: #{model_debug_forward.8} parent=0 // pred_check_branch
    %25 = sbr.rel (0) target = $region29
  $region28: #{model_debug_forward.8} parent=0 // pred_region
    _
  $region29: #{model_debug_forward.8} parent=0 // pred_fallthru
    _
  %v27 = vld [vmem:[%s2] sm:$0xff]
  %v28 = vld [vmem:[%s2 + $0x8] sm:$0xff]
  %v29 = vld [vmem:[%s0] sm:$0xf]
  %v30 = vld [vmem:[%s0 + $0x4] sm:$0xf]
  %v31 = vld [vmem:[%s0 + $0x8] sm:$0xf]
  %v32 = vld [vmem:[%s0 + $0xc] sm:$0xf]
  %v33 = vld [vmem:[%s0 + $0x10] sm:$0xf]
  %v34 = vld [vmem:[%s0 + $0x14] sm:$0xf]
  %v35 = vld [vmem:[%s0 + $0x18] sm:$0xf]
  %v36 = vld [vmem:[%s0 + $0x1c] sm:$0xf]
  %v37 = vld [vmem:[%s0 + $0x20] sm:$0xf]
  %v38 = vld [vmem:[%s0 + $0x24] sm:$0xf]
  %v39 = vld [vmem:[%s0 + $0x28] sm:$0xf]
  %v40 = vld [vmem:[%s0 + $0x2c] sm:$0xf]
  %v41 = vld [vmem:[%s0 + $0x30] sm:$0xf]
  %v42 = vld [vmem:[%s0 + $0x34] sm:$0xf]
  %v43 = vld [vmem:[%s0 + $0x38] sm:$0xf]
  %v44 = vld [vmem:[%s0 + $0x3c] sm:$0xf]
  %v45 = vld [vmem:[%s0 + $0x40] sm:$0xf]
  %v46 = vld [vmem:[%s0 + $0x44] sm:$0xf]
  %v47 = vld [vmem:[%s3] sm:$0xf]
  %v48 = vld [vmem:[%s3 + $0x4] sm:$0xf]
  %v49 = vld [vmem:[%s1] sm:$0xf]
  %v50 = vld [vmem:[%s1 + $0x4] sm:$0xf]
  %v51 = vld [vmem:[%s1 + $0x8] sm:$0xf]
  %v52 = vld [vmem:[%s1 + $0xc] sm:$0xf]
  %v53 = vld [vmem:[%s1 + $0x10] sm:$0xf]
  %v54 = vld [vmem:[%s1 + $0x14] sm:$0xf]
  %v55 = vld [vmem:[%s1 + $0x18] sm:$0xf]
  %v56 = vld [vmem:[%s1 + $0x1c] sm:$0xf]
  %v57 = vld [vmem:[%s1 + $0x20] sm:$0xf]
  %v60 = vunpack.c.l.b16 %v47
  %v61 = vunpack.c.l.b16 %v48
  %v62 = vpack.c.b16 %v61, %v60
  %v72 = vunpack.c.l.b16 %v49
  %v73 = vunpack.c.l.b16 %v50
  %v74 = vunpack.c.l.b16 %v51
  %v75 = vunpack.c.l.b16 %v52
  %v76 = vunpack.c.l.b16 %v53
  %v77 = vunpack.c.l.b16 %v54
  %v78 = vunpack.c.l.b16 %v55
  %v79 = vunpack.c.l.b16 %v56
  %v80 = vunpack.c.l.b16 %v57
  %v81 = vpack.c.b16 %v73, %v72
  %v82 = vpack.c.b16 %v75, %v74
  %v83 = vpack.c.b16 %v77, %v76
  %v84 = vpack.c.b16 %v79, %v78
  %v85 = vpack.c.b16 %v80, %v80
  %vm90 = vcmask 588800
  %v92 = vsel %vm90, %v62, 0
  %vm94 = vcmask 1043456
  %v96 = vsel %vm94, %v85, 0
  %98 = vmatprep.subr.bf16.mxu0 0
  %99 = vmatpush1.bf16.msra.mxu0 0
  %100 = vmatprep.subr.bf16.mxu0 0
  %101 = vmatpush1.bf16.msra.mxu0 0
  %102 = vmatprep.subr.bf16.mxu0 0
  %103 = vmatpush1.bf16.msra.mxu0 0
  %104 = vmatprep.subr.bf16.mxu0 0
  %105 = vmatpush1.bf16.msra.mxu0 %v96
  %106 = vmatprep.subr.bf16.mxu0 0
  %107 = vmatpush1.bf16.msra.mxu0 %v84
  %108 = vmatprep.subr.bf16.mxu0 0
  %109 = vmatpush1.bf16.msra.mxu0 %v83
  %110 = vmatprep.subr.bf16.mxu0 0
  %111 = vmatpush1.bf16.msra.mxu0 %v82
  %112 = vmatprep.subr.bf16.mxu0 0
  %113 = vmatpush1.bf16.msra.mxu0 %v81
  %114 = vmatprep.subr.bf16.mxu0 0
  %115 = vmatpush2.bf16.msra.mxu0 0
  %116 = vmatprep.subr.bf16.mxu0 0
  %117 = vmatpush2.bf16.msra.mxu0 0
  %118 = vmatprep.subr.bf16.mxu0 0
  %119 = vmatpush2.bf16.msra.mxu0 0
  %120 = vmatprep.subr.bf16.mxu0 0
  %121 = vmatpush2.bf16.msra.mxu0 0
  %122 = vmatprep.subr.bf16.mxu0 0
  %123 = vmatpush2.bf16.msra.mxu0 0
  %124 = vmatprep.subr.bf16.mxu0 0
  %125 = vmatpush2.bf16.msra.mxu0 0
  %126 = vmatprep.subr.bf16.mxu0 0
  %127 = vmatpush2.bf16.msra.mxu0 0
  %128 = vmatprep.subr.bf16.mxu0 0
  %129 = vmatpush2.bf16.msra.mxu0 0
  %130 = vmatprep.mubr.bf16.mxu0 0
  %131 = vmatmul.mubr.bf16.gmra.mxu0 %v92
  %v132 = vpop.f32.mrf.mxu0
  %v133 = vadd.f32 0.0, %v132
  %v134 = vpop.f32.mrf.mxu0
  %v135 = vpop.f32.mrf.mxu0
  %v136 = vadd.f32 0.0, %v135
  %v137 = vpop.f32.mrf.mxu0
  %138 = vdwg.mxu0
  %v141 = vunpack.c.l.b16 %v27
  %v142 = vunpack.c.h.b16 %v27
  %v143 = vunpack.c.l.b16 %v28
  %v144 = vunpack.c.h.b16 %v28
  %v145 = vpack.c.b16 %v143, %v141
  %v146 = vpack.c.b16 %v144, %v142
  %v166 = vunpack.c.l.b16 %v29
  %v167 = vunpack.c.l.b16 %v30
  %v168 = vunpack.c.l.b16 %v31
  %v169 = vunpack.c.l.b16 %v32
  %v170 = vunpack.c.l.b16 %v33
  %v171 = vunpack.c.l.b16 %v34
  %v172 = vunpack.c.l.b16 %v35
  %v173 = vunpack.c.l.b16 %v36
  %v174 = vunpack.c.l.b16 %v37
  %v175 = vunpack.c.l.b16 %v38
  %v176 = vunpack.c.l.b16 %v39
  %v177 = vunpack.c.l.b16 %v40
  %v178 = vunpack.c.l.b16 %v41
  %v179 = vunpack.c.l.b16 %v42
  %v180 = vunpack.c.l.b16 %v43
  %v181 = vunpack.c.l.b16 %v44
  %v182 = vunpack.c.l.b16 %v45
  %v183 = vunpack.c.l.b16 %v46
  %v184 = vpack.c.b16 %v167, %v166
  %v185 = vpack.c.b16 %v169, %v168
  %v186 = vpack.c.b16 %v171, %v170
  %v187 = vpack.c.b16 %v173, %v172
  %v188 = vpack.c.b16 %v175, %v174
  %v189 = vpack.c.b16 %v177, %v176
  %v190 = vpack.c.b16 %v179, %v178
  %v191 = vpack.c.b16 %v181, %v180
  %v192 = vpack.c.b16 %v183, %v182
  %vm202 = vcmask 130048
  %v204 = vsel %vm202, %v146, 0
  %206 = vmatprep.subr.bf16.mxu0 0
  %207 = vmatpush1.bf16.msra.mxu0 %v191
  %208 = vmatprep.subr.bf16.mxu0 0
  %209 = vmatpush1.bf16.msra.mxu0 %v190
  %210 = vmatprep.subr.bf16.mxu0 0
  %211 = vmatpush1.bf16.msra.mxu0 %v189
  %212 = vmatprep.subr.bf16.mxu0 0
  %213 = vmatpush1.bf16.msra.mxu0 %v188
  %214 = vmatprep.subr.bf16.mxu0 0
  %215 = vmatpush1.bf16.msra.mxu0 %v187
  %216 = vmatprep.subr.bf16.mxu0 0
  %217 = vmatpush1.bf16.msra.mxu0 %v186
  %218 = vmatprep.subr.bf16.mxu0 0
  %219 = vmatpush1.bf16.msra.mxu0 %v185
  %220 = vmatprep.subr.bf16.mxu0 0
  %221 = vmatpush1.bf16.msra.mxu0 %v184
  %222 = vmatprep.subr.bf16.mxu0 0
  %223 = vmatpush2.bf16.msra.mxu0 0
  %224 = vmatprep.subr.bf16.mxu0 0
  %225 = vmatpush2.bf16.msra.mxu0 0
  %226 = vmatprep.subr.bf16.mxu0 0
  %227 = vmatpush2.bf16.msra.mxu0 0
  %228 = vmatprep.subr.bf16.mxu0 0
  %229 = vmatpush2.bf16.msra.mxu0 0
  %230 = vmatprep.subr.bf16.mxu0 0
  %231 = vmatpush2.bf16.msra.mxu0 0
  %232 = vmatprep.subr.bf16.mxu0 0
  %233 = vmatpush2.bf16.msra.mxu0 0
  %234 = vmatprep.subr.bf16.mxu0 0
  %235 = vmatpush2.bf16.msra.mxu0 0
  %236 = vmatprep.subr.bf16.mxu0 0
  %237 = vmatpush2.bf16.msra.mxu0 %v192
  %238 = vmatprep.mubr.bf16.mxu0 %v204
  %239 = vmatmul.mubr.bf16.gmra.mxu0 %v145
  %v240 = vpop.f32.mrf.mxu0
  %v241 = vadd.f32 %v133, %v240
  %v242 = vpop.f32.mrf.mxu0
  %v243 = vpop.f32.mrf.mxu0
  %v244 = vadd.f32 %v136, %v243
  %v245 = vpop.f32.mrf.mxu0
  %246 = vdwg.mxu0
  %v247 = vld [vmem:[%s4] sm:$0xff]
  %v248 = vld [vmem:[%s4 + $0x8] sm:$0xff]
  %250 = vset.pattern.permute.xlu0 0
  %251 = vperm.xlu0 %250, %v247
  %v252 = vpop.permute.xlu0 %251
  %255 = vset.pattern.permute.xlu0 0
  %256 = vperm.xlu0 %255, %v248
  %v257 = vpop.permute.xlu0 %256
  %v259 = vadd.f32 %v241, %v252
  %v260 = vadd.f32 %v244, %v257
  %v261 = vmax.f32 %v259, 0.0
  %v262 = vmax.f32 %v260, 0.0
  %v263 = vld [vmem:[%s5] sm:$0x3]
  %v264 = vpack.c.bf16 %v262, %v261
  %v265 = vld [vmem:[%s6] sm:$0x7]
  %267 = vset.pattern.permute.xlu0 0
  %268 = vperm.xlu0 %267, %v265
  %v269 = vpop.permute.xlu0 %268
  %v272 = vsel %vm202, %v263, 0
  %274 = vmatprep.subr.bf16.mxu0 0
  %275 = vmatpush1.bf16.msra.mxu0 0
  %276 = vmatprep.subr.bf16.mxu0 0
  %277 = vmatpush1.bf16.msra.mxu0 0
  %278 = vmatprep.subr.bf16.mxu0 0
  %279 = vmatpush1.bf16.msra.mxu0 0
  %280 = vmatprep.subr.bf16.mxu0 0
  %281 = vmatpush1.bf16.msra.mxu0 0
  %282 = vmatprep.subr.bf16.mxu0 0
  %283 = vmatpush1.bf16.msra.mxu0 0
  %284 = vmatprep.subr.bf16.mxu0 0
  %285 = vmatpush1.bf16.msra.mxu0 0
  %286 = vmatprep.subr.bf16.mxu0 0
  %287 = vmatpush1.bf16.msra.mxu0 0
  %288 = vmatprep.subr.bf16.mxu0 0
  %289 = vmatpush1.bf16.msra.mxu0 %v264
  %290 = vmatprep.subr.bf16.mxu0 0
  %291 = vmatpush2.bf16.msra.mxu0 0
  %292 = vmatprep.subr.bf16.mxu0 0
  %293 = vmatpush2.bf16.msra.mxu0 0
  %294 = vmatprep.subr.bf16.mxu0 0
  %295 = vmatpush2.bf16.msra.mxu0 0
  %296 = vmatprep.subr.bf16.mxu0 0
  %297 = vmatpush2.bf16.msra.mxu0 0
  %298 = vmatprep.subr.bf16.mxu0 0
  %299 = vmatpush2.bf16.msra.mxu0 0
  %300 = vmatprep.subr.bf16.mxu0 0
  %301 = vmatpush2.bf16.msra.mxu0 0
  %302 = vmatprep.subr.bf16.mxu0 0
  %303 = vmatpush2.bf16.msra.mxu0 0
  %304 = vmatprep.subr.bf16.mxu0 0
  %305 = vmatpush2.bf16.msra.mxu0 0
  %306 = vmatprep.mubr.bf16.mxu0 0
  %307 = vmatmul.mubr.bf16.gmra.mxu0 %v272
  %v308 = vpop.f32.mrf.mxu0
  %v309 = vadd.f32 %v269, %v308
  %v310 = vpop.f32.mrf.mxu0
  %v311 = vpop.f32.mrf.mxu0
  %v312 = vpop.f32.mrf.mxu0
  %313 = vdwg.mxu0
  %v314 = vpack.c.bf16 %v309, %v309
  %vm315 = vcmask 1041408
  %vm316 = vsmask.f32 1280
  %vm317 = vmand %vm315, %vm316
  %v318 = vld [vmem:[%s7] sm:$0x3]
  %v319 = vsel %vm317, %v314, %v318
  %320 = vst [vmem:[%s7] sm:$0x3] %v319
  // Predicated region
  $region30: #{model_debug_forward.8} parent=0 // pred_check
    _
  $region31: #{model_debug_forward.8} parent=0 // pred_check_branch
    %322 = sbr.rel (0) target = $region33
  $region32: #{model_debug_forward.8} parent=0 // pred_region
    _
  $region33: #{model_debug_forward.8} parent=0 // pred_fallthru
    _
  // Predicated region
  $region34: #{model_debug_forward.8} parent=0 // pred_check
    _
  $region35: #{model_debug_forward.8} parent=0 // pred_check_branch
    %324 = sbr.rel (0) target = $region37
  $region36: #{model_debug_forward.8} parent=0 // pred_region
    _
  $region37: #{model_debug_forward.8} parent=0 // pred_fallthru
    _

// kernel: model_debug_forward.9
$region0: #{model_debug_forward.9}
  #allocation0 [shape = 'u32[]', space=smem, size = 0x4, offset = 0x4, fixed_abs, tag = 'smem constant byte address 0x4 - core index']
  #allocation1 [shape = 'u32[144,128]{1,0:T(1,128)}', space=vmem, size = 0x12000, scoped, tag = 'internal scratch']
  %s0 = inlined_call_operand.vmem [shape: bf16[6,8,8], index: 0, kind: input, shape index: {}]
  %s1 = inlined_call_operand.vmem [shape: bf16[8,16], index: 1, kind: input, shape index: {}]
  %s2 = inlined_call_operand.vmem [shape: bf16[16,8], index: 2, kind: input, shape index: {}]
  %s3 = inlined_call_operand.hbm [shape: f32[6,16,16], index: 3, kind: output, shape index: {}]
  %s4 = sld [smem:[#allocation0]]
  $region45: #{model_debug_forward.9} parent=0
    _
  %s6 = ssub.s32 1, %s4
  %s7 = scalar_select 0, %s6, %s4
  $region1: #{model_debug_forward.9} parent=0
    #allocation2 [shape = 'u8[49152]{0}', space=vmem, size = 0xc000, scoped, tag = 'output window, operand 0']
    #allocation3 [shape = 's32[2]{0}', space=sflag, size = 0x8, scoped, tag = 'scoped memory for model_debug_forward.9']
    %8 = vsyncpa [#allocation3], 0
    %s9 = scalar_lea.sflag [#allocation3], 1
    %10 = vsyncpa %s9, 0
    loop: start=0, step=1, limit=4
    $region2: #{model_debug_forward.9} parent=1 // loop_pre_header
      _
    $region3: #{model_debug_forward.9} parent=1 // loop_header
      %s12 = sphi 0, %s16
      %p13 = scmp.ge.s32.totalorder %s12, 4
      %s22 = sphi 0, %s24
      %s25 = sphi 0, %s22
      %s26 = sphi 0, %s25
      %s42 = sphi 0, %s26
      %s46 = sphi 0, %s46
      %s48 = sphi 0, %s46
      %s49 = sphi 0, %s48
      %s63 = sphi 0, %s49
      %s67 = sphi 0, %s67
      %s69 = sphi 0, %s67
      %s70 = sphi 0, %s69
      %s84 = sphi 0, %s70
      %s90 = sphi 0, %s92
      %s93 = sphi 0, %s90
      %s94 = sphi 0, %s93
      %s110 = sphi 0, %s94
    $region4: #{model_debug_forward.9} parent=1 // loop_header_branch
      %15 = sbr.rel (%p13) target = $region8
    $region5: #{model_debug_forward.9} parent=1 // loop_body
      %s17 = ssub.s32 %s12, 1
      %s18 = ssub.s32 %s12, 2
      %s19 = sadd.s32 %s12, 1
      %s20 = ssub.s32 %s12, %s19
      %p21 = scmp.eq.s32.totalorder %s20, 0
      %s23 = sadd.s32 %s22, 1
      %s24 = scalar_select %p21, %s22, %s23
      %p27 = pneg %p21
      %p28 = scmp.eq.s32.totalorder %s12, 1
      %p29 = por %p27, %p28
      %p30 = scmp.ne.s32.totalorder %s22, %s25
      %p31 = scmp.eq.s32.totalorder %s12, 0
      %p32 = por %p30, %p31
      %p33 = scmp.ne.s32.totalorder %s22, %s25
      %p34 = scmp.eq.s32.totalorder %s17, 1
      %p35 = por %p33, %p34
      %p36 = scmp.ne.s32.totalorder %s25, %s26
      %p37 = scmp.eq.s32.totalorder %s17, 0
      %p38 = por %p36, %p37
      %p39 = scmp.ne.s32.totalorder %s25, %s26
      %p40 = scmp.eq.s32.totalorder %s18, 1
      %p41 = por %p39, %p40
      %p43 = scmp.ne.s32.totalorder %s26, %s42
      %p44 = scmp.eq.s32.totalorder %s18, 0
      %p45 = por %p43, %p44
      %s47 = sadd.s32 %s46, 1
      %p50 = scmp.eq.s32.totalorder %s12, 1
      %p51 = scmp.ne.s32.totalorder %s46, %s48
      %p52 = scmp.eq.s32.totalorder %s12, 0
      %p53 = por %p51, %p52
      %p54 = scmp.ne.s32.totalorder %s46, %s48
      %p55 = scmp.eq.s32.totalorder %s17, 1
      %p56 = por %p54, %p55
      %p57 = scmp.ne.s32.totalorder %s48, %s49
      %p58 = scmp.eq.s32.totalorder %s17, 0
      %p59 = por %p57, %p58
      %p60 = scmp.ne.s32.totalorder %s48, %s49
      %p61 = scmp.eq.s32.totalorder %s18, 1
      %p62 = por %p60, %p61
      %p64 = scmp.ne.s32.totalorder %s49, %s63
      %p65 = scmp.eq.s32.totalorder %s18, 0
      %p66 = por %p64, %p65
      %s68 = sadd.s32 %s67, 1
      %p71 = scmp.eq.s32.totalorder %s12, 1
      %p72 = scmp.ne.s32.totalorder %s67, %s69
      %p73 = scmp.eq.s32.totalorder %s12, 0
      %p74 = por %p72, %p73
      %p75 = scmp.ne.s32.totalorder %s67, %s69
      %p76 = scmp.eq.s32.totalorder %s17, 1
      %p77 = por %p75, %p76
      %p78 = scmp.ne.s32.totalorder %s69, %s70
      %p79 = scmp.eq.s32.totalorder %s17, 0
      %p80 = por %p78, %p79
      %p81 = scmp.ne.s32.totalorder %s69, %s70
      %p82 = scmp.eq.s32.totalorder %s18, 1
      %p83 = por %p81, %p82
      %p85 = scmp.ne.s32.totalorder %s70, %s84
      %p86 = scmp.eq.s32.totalorder %s18, 0
      %p87 = por %p85, %p86
      %s88 = ssub.s32 %s12, %s19
      %p89 = scmp.eq.s32.totalorder %s88, 0
      %s91 = sadd.s32 %s90, 1
      %s92 = scalar_select %p89, %s90, %s91
      %p95 = pneg %p89
      %p96 = scmp.eq.s32.totalorder %s12, 1
      %p97 = por %p95, %p96
      %p98 = scmp.ne.s32.totalorder %s90, %s93
      %p99 = scmp.eq.s32.totalorder %s12, 0
      %p100 = por %p98, %p99
      %p101 = scmp.ne.s32.totalorder %s90, %s93
      %p102 = scmp.eq.s32.totalorder %s17, 1
      %p103 = por %p101, %p102
      %p104 = scmp.ne.s32.totalorder %s93, %s94
      %p105 = scmp.eq.s32.totalorder %s17, 0
      %p106 = por %p104, %p105
      %p107 = scmp.ne.s32.totalorder %s93, %s94
      %p108 = scmp.eq.s32.totalorder %s18, 1
      %p109 = por %p107, %p108
      %p111 = scmp.ne.s32.totalorder %s94, %s110
      %p112 = scmp.eq.s32.totalorder %s18, 0
      %p113 = por %p111, %p112
      %p114 = scmp.le.s32.totalorder 1, %s12
      %p115 = scmp.lt.s32.totalorder %s12, 3
      %p116 = pnand %p114, %p115
      %p117 = pneg %p116
      // Predicated region
      $region9: #{model_debug_forward.9} parent=5 // pred_check
        _
      $region10: #{model_debug_forward.9} parent=5 // pred_check_branch
        %119 = sbr.rel (%p116) target = $region12
      $region11: #{model_debug_forward.9} parent=5 // pred_region
        %s120 = ssub.s32 %s12, 1
        // Predicated region
        $region13: #{model_debug_forward.9} parent=11 // pred_check
          %p121 = pneg %p59
        $region14: #{model_debug_forward.9} parent=11 // pred_check_branch
          %123 = sbr.rel (%p121) target = $region16
        $region15: #{model_debug_forward.9} parent=11 // pred_region
          _
        $region16: #{model_debug_forward.9} parent=11 // pred_fallthru
          _
        // Predicated region
        $region17: #{model_debug_forward.9} parent=11 // pred_check
          %p124 = pneg %p80
        $region18: #{model_debug_forward.9} parent=11 // pred_check_branch
          %126 = sbr.rel (%p124) target = $region20
        $region19: #{model_debug_forward.9} parent=11 // pred_region
          _
        $region20: #{model_debug_forward.9} parent=11 // pred_fallthru
          _
      $region12: #{model_debug_forward.9} parent=5 // pred_fallthru
        _
      %p127 = scmp.lt.s32.totalorder %s12, 2
      // Predicated region
      $region21: #{model_debug_forward.9} parent=5 // pred_check
        %p128 = pneg %p127
      $region22: #{model_debug_forward.9} parent=5 // pred_check_branch
        %130 = sbr.rel (%p128) target = $region24
      $region23: #{model_debug_forward.9} parent=5 // pred_region
        // Predicated region
        $region25: #{model_debug_forward.9} parent=23 // pred_check
          %p131 = pneg %p32
        $region26: #{model_debug_forward.9} parent=23 // pred_check_branch
          %133 = sbr.rel (%p131) target = $region28
        $region27: #{model_debug_forward.9} parent=23 // pred_region
          %s134 = smul.u32 3, %s12
          %p135 = scmp.lt.s32.totalorder %s134, 5
          %s136 = scalar_select %p135, %s134, 5
          %s137 = smul.addr %s136, 4
          %s138 = scalar_lea.vmem %s0, %s137
          %s139 = smul.u32 3, %s12
        $region28: #{model_debug_forward.9} parent=23 // pred_fallthru
          _
      $region24: #{model_debug_forward.9} parent=5 // pred_fallthru
        _
      %p140 = scmp.le.s32.totalorder 1, %s12
      %p141 = scmp.lt.s32.totalorder %s12, 3
      %p142 = pnand %p140, %p141
      %p143 = pneg %p142
      // Predicated region
      $region29: #{model_debug_forward.9} parent=5 // pred_check
        _
      $region30: #{model_debug_forward.9} parent=5 // pred_check_branch
        %145 = sbr.rel (%p142) target = $region32
      $region31: #{model_debug_forward.9} parent=5 // pred_region
        %s146 = ssub.s32 %s12, 1
        %s147 = smul.u32 3, %s17
        %p148 = scmp.lt.s32.totalorder %s147, 5
        %s149 = scalar_select %p148, %s147, 5
        %s150 = smul.addr %s149, 4
        %s151 = scalar_lea.vmem %s0, %s150
        %p152 = pneg %p38
        %p153 = pneg %p35
        %p154 = pneg %p59
        %p155 = pneg %p56
        %p156 = pneg %p80
        %p157 = pneg %p77
        %p158 = pneg %p106
        %p159 = pneg %p103
        %s160 = sand.u32 %s93, 1
        %s161 = scalar_lea.sflag [#allocation3], %s160
        %s162 = sand.u32 %s93, 1
        %s163 = smul.addr %s162, 48
        %s164 = scalar_lea.vmem [#allocation2], %s163
        %s165 = smul.u32 3, %s17
        %p166 = scmp.lt.s32.totalorder %s165, 5
        %s167 = scalar_select %p166, %s165, 5
        %s168 = smul.addr %s167, 4
        %s169 = scalar_lea.vmem %s0, %s168
        %s170 = smul.u32 3, %s17
        %s171 = smul.u32 3, %s17
        %v173 = vld [vmem:[%s1] sm:$0xf]
        %v174 = vld [vmem:[%s2] sm:$0xf]
        %v175 = vld [vmem:[%s2 + $0x4] sm:$0xf]
        %v176 = vld [vmem:[%s169] sm:$0xf]
        %vm177 = vcmask 64512
        %v179 = vsel %vm177, %v176, 0
        %vm181 = vcmask 1043456
        %v183 = vsel %vm181, %v173, 0
        %185 = vmatprep.subr.bf16.mxu0 0
        %186 = vmatpush1.bf16.msra.mxu0 0
        %187 = vmatprep.subr.bf16.mxu0 0
        %188 = vmatpush1.bf16.msra.mxu0 0
        %189 = vmatprep.subr.bf16.mxu0 0
        %190 = vmatpush1.bf16.msra.mxu0 0
        %191 = vmatprep.subr.bf16.mxu0 0
        %192 = vmatpush1.bf16.msra.mxu0 0
        %193 = vmatprep.subr.bf16.mxu0 0
        %194 = vmatpush1.bf16.msra.mxu0 0
        %195 = vmatprep.subr.bf16.mxu0 0
        %196 = vmatpush1.bf16.msra.mxu0 0
        %197 = vmatprep.subr.bf16.mxu0 0
        %198 = vmatpush1.bf16.msra.mxu0 0
        %199 = vmatprep.subr.bf16.mxu0 0
        %200 = vmatpush1.bf16.msra.mxu0 %v183
        %201 = vmatprep.subr.bf16.mxu0 0
        %202 = vmatpush2.bf16.msra.mxu0 0
        %203 = vmatprep.subr.bf16.mxu0 0
        %204 = vmatpush2.bf16.msra.mxu0 0
        %205 = vmatprep.subr.bf16.mxu0 0
        %206 = vmatpush2.bf16.msra.mxu0 0
        %207 = vmatprep.subr.bf16.mxu0 0
        %208 = vmatpush2.bf16.msra.mxu0 0
        %209 = vmatprep.subr.bf16.mxu0 0
        %210 = vmatpush2.bf16.msra.mxu0 0
        %211 = vmatprep.subr.bf16.mxu0 0
        %212 = vmatpush2.bf16.msra.mxu0 0
        %213 = vmatprep.subr.bf16.mxu0 0
        %214 = vmatpush2.bf16.msra.mxu0 0
        %215 = vmatprep.subr.bf16.mxu0 0
        %216 = vmatpush2.bf16.msra.mxu0 0
        %217 = vmatprep.mubr.bf16.mxu0 0
        %218 = vmatmul.mubr.bf16.gmra.mxu0 %v179
        %v219 = vpop.f32.mrf.mxu0
        %v220 = vadd.f32 0.0, %v219
        %v221 = vpop.f32.mrf.mxu0
        %v222 = vpop.f32.mrf.mxu0
        %v223 = vpop.f32.mrf.mxu0
        %224 = vdwg.mxu0
        %v225 = vpack.c.bf16 %v220, %v220
        %v228 = vunpack.c.l.b16 %v174
        %v229 = vunpack.c.l.b16 %v175
        %v230 = vpack.c.b16 %v229, %v228
        %v232 = vsel %vm177, %v230, 0
        %v235 = vsel %vm181, %v225, 0
        %237 = vmatprep.subr.bf16.mxu0 0
        %238 = vmatpush1.bf16.msra.mxu0 0
        %239 = vmatprep.subr.bf16.mxu0 0
        %240 = vmatpush1.bf16.msra.mxu0 0
        %241 = vmatprep.subr.bf16.mxu0 0
        %242 = vmatpush1.bf16.msra.mxu0 0
        %243 = vmatprep.subr.bf16.mxu0 0
        %244 = vmatpush1.bf16.msra.mxu0 0
        %245 = vmatprep.subr.bf16.mxu0 0
        %246 = vmatpush1.bf16.msra.mxu0 0
        %247 = vmatprep.subr.bf16.mxu0 0
        %248 = vmatpush1.bf16.msra.mxu0 0
        %249 = vmatprep.subr.bf16.mxu0 0
        %250 = vmatpush1.bf16.msra.mxu0 0
        %251 = vmatprep.subr.bf16.mxu0 0
        %252 = vmatpush1.bf16.msra.mxu0 %v235
        %253 = vmatprep.subr.bf16.mxu0 0
        %254 = vmatpush2.bf16.msra.mxu0 0
        %255 = vmatprep.subr.bf16.mxu0 0
        %256 = vmatpush2.bf16.msra.mxu0 0
        %257 = vmatprep.subr.bf16.mxu0 0
        %258 = vmatpush2.bf16.msra.mxu0 0
        %259 = vmatprep.subr.bf16.mxu0 0
        %260 = vmatpush2.bf16.msra.mxu0 0
        %261 = vmatprep.subr.bf16.mxu0 0
        %262 = vmatpush2.bf16.msra.mxu0 0
        %263 = vmatprep.subr.bf16.mxu0 0
        %264 = vmatpush2.bf16.msra.mxu0 0
        %265 = vmatprep.subr.bf16.mxu0 0
        %266 = vmatpush2.bf16.msra.mxu0 0
        %267 = vmatprep.subr.bf16.mxu0 0
        %268 = vmatpush2.bf16.msra.mxu0 0
        %269 = vmatprep.mubr.bf16.mxu0 0
        %270 = vmatmul.mubr.bf16.gmra.mxu0 %v232
        %v271 = vpop.f32.mrf.mxu0
        %v272 = vadd.f32 0.0, %v271
        %v273 = vpop.f32.mrf.mxu0
        %v274 = vpop.f32.mrf.mxu0
        %v275 = vadd.f32 0.0, %v274
        %v276 = vpop.f32.mrf.mxu0
        %277 = vdwg.mxu0
        %vm278 = vcmask 130048
        %279 = vst.msk [vmem:[%s164] sm:$0xff] %vm278, %v272
        %280 = vst.msk [vmem:[%s164 + $0x8] sm:$0xff] %vm278, %v275
        %s281 = scalar_lea.vmem %s169, 4
        %v282 = vld [vmem:[%s281] sm:$0xf]
        %v284 = vsel %vm177, %v282, 0
        %286 = vmatprep.subr.bf16.mxu0 0
        %287 = vmatpush1.bf16.msra.mxu0 0
        %288 = vmatprep.subr.bf16.mxu0 0
        %289 = vmatpush1.bf16.msra.mxu0 0
        %290 = vmatprep.subr.bf16.mxu0 0
        %291 = vmatpush1.bf16.msra.mxu0 0
        %292 = vmatprep.subr.bf16.mxu0 0
        %293 = vmatpush1.bf16.msra.mxu0 0
        %294 = vmatprep.subr.bf16.mxu0 0
        %295 = vmatpush1.bf16.msra.mxu0 0
        %296 = vmatprep.subr.bf16.mxu0 0
        %297 = vmatpush1.bf16.msra.mxu0 0
        %298 = vmatprep.subr.bf16.mxu0 0
        %299 = vmatpush1.bf16.msra.mxu0 0
        %300 = vmatprep.subr.bf16.mxu0 0
        %301 = vmatpush1.bf16.msra.mxu0 %v183
        %302 = vmatprep.subr.bf16.mxu0 0
        %303 = vmatpush2.bf16.msra.mxu0 0
        %304 = vmatprep.subr.bf16.mxu0 0
        %305 = vmatpush2.bf16.msra.mxu0 0
        %306 = vmatprep.subr.bf16.mxu0 0
        %307 = vmatpush2.bf16.msra.mxu0 0
        %308 = vmatprep.subr.bf16.mxu0 0
        %309 = vmatpush2.bf16.msra.mxu0 0
        %310 = vmatprep.subr.bf16.mxu0 0
        %311 = vmatpush2.bf16.msra.mxu0 0
        %312 = vmatprep.subr.bf16.mxu0 0
        %313 = vmatpush2.bf16.msra.mxu0 0
        %314 = vmatprep.subr.bf16.mxu0 0
        %315 = vmatpush2.bf16.msra.mxu0 0
        %316 = vmatprep.subr.bf16.mxu0 0
        %317 = vmatpush2.bf16.msra.mxu0 0
        %318 = vmatprep.mubr.bf16.mxu0 0
        %319 = vmatmul.mubr.bf16.gmra.mxu0 %v284
        %v320 = vpop.f32.mrf.mxu0
        %v321 = vadd.f32 0.0, %v320
        %v322 = vpop.f32.mrf.mxu0
        %v323 = vpop.f32.mrf.mxu0
        %v324 = vpop.f32.mrf.mxu0
        %325 = vdwg.mxu0
        %v326 = vpack.c.bf16 %v321, %v321
        %v328 = vsel %vm181, %v326, 0
        %330 = vmatprep.subr.bf16.mxu0 0
        %331 = vmatpush1.bf16.msra.mxu0 0
        %332 = vmatprep.subr.bf16.mxu0 0
        %333 = vmatpush1.bf16.msra.mxu0 0
        %334 = vmatprep.subr.bf16.mxu0 0
        %335 = vmatpush1.bf16.msra.mxu0 0
        %336 = vmatprep.subr.bf16.mxu0 0
        %337 = vmatpush1.bf16.msra.mxu0 0
        %338 = vmatprep.subr.bf16.mxu0 0
        %339 = vmatpush1.bf16.msra.mxu0 0
        %340 = vmatprep.subr.bf16.mxu0 0
        %341 = vmatpush1.bf16.msra.mxu0 0
        %342 = vmatprep.subr.bf16.mxu0 0
        %343 = vmatpush1.bf16.msra.mxu0 0
        %344 = vmatprep.subr.bf16.mxu0 0
        %345 = vmatpush1.bf16.msra.mxu0 %v328
        %346 = vmatprep.subr.bf16.mxu0 0
        %347 = vmatpush2.bf16.msra.mxu0 0
        %348 = vmatprep.subr.bf16.mxu0 0
        %349 = vmatpush2.bf16.msra.mxu0 0
        %350 = vmatprep.subr.bf16.mxu0 0
        %351 = vmatpush2.bf16.msra.mxu0 0
        %352 = vmatprep.subr.bf16.mxu0 0
        %353 = vmatpush2.bf16.msra.mxu0 0
        %354 = vmatprep.subr.bf16.mxu0 0
        %355 = vmatpush2.bf16.msra.mxu0 0
        %356 = vmatprep.subr.bf16.mxu0 0
        %357 = vmatpush2.bf16.msra.mxu0 0
        %358 = vmatprep.subr.bf16.mxu0 0
        %359 = vmatpush2.bf16.msra.mxu0 0
        %360 = vmatprep.subr.bf16.mxu0 0
        %361 = vmatpush2.bf16.msra.mxu0 0
        %362 = vmatprep.mubr.bf16.mxu0 0
        %363 = vmatmul.mubr.bf16.gmra.mxu0 %v232
        %v364 = vpop.f32.mrf.mxu0
        %v365 = vadd.f32 0.0, %v364
        %v366 = vpop.f32.mrf.mxu0
        %v367 = vpop.f32.mrf.mxu0
        %v368 = vadd.f32 0.0, %v367
        %v369 = vpop.f32.mrf.mxu0
        %370 = vdwg.mxu0
        %s371 = scalar_lea.vmem %s164, 16 [#allocation2]
        %372 = vst.msk [vmem:[%s371] sm:$0xff] %vm278, %v365
        %373 = vst.msk [vmem:[%s371 + $0x8] sm:$0xff] %vm278, %v368
        %s374 = scalar_lea.vmem %s169, 8
        %v375 = vld [vmem:[%s374] sm:$0xf]
        %v377 = vsel %vm177, %v375, 0
        %379 = vmatprep.subr.bf16.mxu0 0
        %380 = vmatpush1.bf16.msra.mxu0 0
        %381 = vmatprep.subr.bf16.mxu0 0
        %382 = vmatpush1.bf16.msra.mxu0 0
        %383 = vmatprep.subr.bf16.mxu0 0
        %384 = vmatpush1.bf16.msra.mxu0 0
        %385 = vmatprep.subr.bf16.mxu0 0
        %386 = vmatpush1.bf16.msra.mxu0 0
        %387 = vmatprep.subr.bf16.mxu0 0
        %388 = vmatpush1.bf16.msra.mxu0 0
        %389 = vmatprep.subr.bf16.mxu0 0
        %390 = vmatpush1.bf16.msra.mxu0 0
        %391 = vmatprep.subr.bf16.mxu0 0
        %392 = vmatpush1.bf16.msra.mxu0 0
        %393 = vmatprep.subr.bf16.mxu0 0
        %394 = vmatpush1.bf16.msra.mxu0 %v183
        %395 = vmatprep.subr.bf16.mxu0 0
        %396 = vmatpush2.bf16.msra.mxu0 0
        %397 = vmatprep.subr.bf16.mxu0 0
        %398 = vmatpush2.bf16.msra.mxu0 0
        %399 = vmatprep.subr.bf16.mxu0 0
        %400 = vmatpush2.bf16.msra.mxu0 0
        %401 = vmatprep.subr.bf16.mxu0 0
        %402 = vmatpush2.bf16.msra.mxu0 0
        %403 = vmatprep.subr.bf16.mxu0 0
        %404 = vmatpush2.bf16.msra.mxu0 0
        %405 = vmatprep.subr.bf16.mxu0 0
        %406 = vmatpush2.bf16.msra.mxu0 0
        %407 = vmatprep.subr.bf16.mxu0 0
        %408 = vmatpush2.bf16.msra.mxu0 0
        %409 = vmatprep.subr.bf16.mxu0 0
        %410 = vmatpush2.bf16.msra.mxu0 0
        %411 = vmatprep.mubr.bf16.mxu0 0
        %412 = vmatmul.mubr.bf16.gmra.mxu0 %v377
        %v413 = vpop.f32.mrf.mxu0
        %v414 = vadd.f32 0.0, %v413
        %v415 = vpop.f32.mrf.mxu0
        %v416 = vpop.f32.mrf.mxu0
        %v417 = vpop.f32.mrf.mxu0
        %418 = vdwg.mxu0
        %v419 = vpack.c.bf16 %v414, %v414
        %v421 = vsel %vm181, %v419, 0
        %423 = vmatprep.subr.bf16.mxu0 0
        %424 = vmatpush1.bf16.msra.mxu0 0
        %425 = vmatprep.subr.bf16.mxu0 0
        %426 = vmatpush1.bf16.msra.mxu0 0
        %427 = vmatprep.subr.bf16.mxu0 0
        %428 = vmatpush1.bf16.msra.mxu0 0
        %429 = vmatprep.subr.bf16.mxu0 0
        %430 = vmatpush1.bf16.msra.mxu0 0
        %431 = vmatprep.subr.bf16.mxu0 0
        %432 = vmatpush1.bf16.msra.mxu0 0
        %433 = vmatprep.subr.bf16.mxu0 0
        %434 = vmatpush1.bf16.msra.mxu0 0
        %435 = vmatprep.subr.bf16.mxu0 0
        %436 = vmatpush1.bf16.msra.mxu0 0
        %437 = vmatprep.subr.bf16.mxu0 0
        %438 = vmatpush1.bf16.msra.mxu0 %v421
        %439 = vmatprep.subr.bf16.mxu0 0
        %440 = vmatpush2.bf16.msra.mxu0 0
        %441 = vmatprep.subr.bf16.mxu0 0
        %442 = vmatpush2.bf16.msra.mxu0 0
        %443 = vmatprep.subr.bf16.mxu0 0
        %444 = vmatpush2.bf16.msra.mxu0 0
        %445 = vmatprep.subr.bf16.mxu0 0
        %446 = vmatpush2.bf16.msra.mxu0 0
        %447 = vmatprep.subr.bf16.mxu0 0
        %448 = vmatpush2.bf16.msra.mxu0 0
        %449 = vmatprep.subr.bf16.mxu0 0
        %450 = vmatpush2.bf16.msra.mxu0 0
        %451 = vmatprep.subr.bf16.mxu0 0
        %452 = vmatpush2.bf16.msra.mxu0 0
        %453 = vmatprep.subr.bf16.mxu0 0
        %454 = vmatpush2.bf16.msra.mxu0 0
        %455 = vmatprep.mubr.bf16.mxu0 0
        %456 = vmatmul.mubr.bf16.gmra.mxu0 %v232
        %v457 = vpop.f32.mrf.mxu0
        %v458 = vadd.f32 0.0, %v457
        %v459 = vpop.f32.mrf.mxu0
        %v460 = vpop.f32.mrf.mxu0
        %v461 = vadd.f32 0.0, %v460
        %v462 = vpop.f32.mrf.mxu0
        %463 = vdwg.mxu0
        %s464 = scalar_lea.vmem %s164, 32 [#allocation2]
        %465 = vst.msk [vmem:[%s464] sm:$0xff] %vm278, %v458
        %466 = vst.msk [vmem:[%s464 + $0x8] sm:$0xff] %vm278, %v461
        %s467 = sand.u32 %s93, 1
        %s468 = scalar_lea.sflag [#allocation3], %s467
        %s469 = sand.u32 %s93, 1
        %s470 = smul.addr %s469, 48
        %s471 = scalar_lea.vmem [#allocation2], %s470
        // Predicated region
        $region33: #{model_debug_forward.9} parent=31 // pred_check
          %p472 = pneg %p103
        $region34: #{model_debug_forward.9} parent=31 // pred_check_branch
          %474 = sbr.rel (%p472) target = $region36
        $region35: #{model_debug_forward.9} parent=31 // pred_region
          %s475 = smul.u32 3, %s17
          %s477 = ssub.s32 768, 768
          %478 = vsyncadd %s468, %s477
          %s479 = smul.addr %s475, 2
          %s480 = smul.addr %s479, 128
          %s481 = scalar_lea.hbm %s3, %s480
          %s482 = sshll.u32 %s471, 4
          %s483 = int_to_ptr.vmem [resolvable:$true] %s482
          %488 = dma.vmem_to_hbm [thread:$0]  %s483, 768, %s481, %s468, 128, 128, 8
        $region36: #{model_debug_forward.9} parent=31 // pred_fallthru
          _
      $region32: #{model_debug_forward.9} parent=5 // pred_fallthru
        _
      %p489 = scmp.le.s32.totalorder 2, %s12
      // Predicated region
      $region37: #{model_debug_forward.9} parent=5 // pred_check
        %p490 = pneg %p489
      $region38: #{model_debug_forward.9} parent=5 // pred_check_branch
        %492 = sbr.rel (%p490) target = $region40
      $region39: #{model_debug_forward.9} parent=5 // pred_region
        %s493 = ssub.s32 %s12, 2
        // Predicated region
        $region41: #{model_debug_forward.9} parent=39 // pred_check
          %p494 = pneg %p109
        $region42: #{model_debug_forward.9} parent=39 // pred_check_branch
          %496 = sbr.rel (%p494) target = $region44
        $region43: #{model_debug_forward.9} parent=39 // pred_region
          %s497 = sand.u32 %s94, 1
          %s498 = scalar_lea.sflag [#allocation3], %s497
          %s499 = sand.u32 %s94, 1
          %s500 = smul.addr %s499, 48
          %s501 = scalar_lea.vmem [#allocation2], %s500
          %502 = dma.done %s498, 768
        $region44: #{model_debug_forward.9} parent=39 // pred_fallthru
          _
      $region40: #{model_debug_forward.9} parent=5 // pred_fallthru
        _
    $region6: #{model_debug_forward.9} parent=1 // loop_footer
      %s16 = sadd.s32 1, %s12
    $region7: #{model_debug_forward.9} parent=1 // loop_footer_branch
      %11 = sbr.rel target = $region3
    $region8: #{model_debug_forward.9} parent=1 // loop_exit
      _
    %503 = vsyncpa [#allocation3], 1
    %s504 = scalar_lea.sflag [#allocation3], 1
    %505 = vsyncpa %s504, 1

</llo_original>
